<compile_context>
chip_gen: v6e
topology: v6e:2x2x1
jax: 0.10.0
libtpu: 0.0.40
codegen_flags: <defaults>
</compile_context>

<pallas_src>
import jax
import jax.numpy as jnp
from jax.experimental import pallas as pl
from jax.experimental.pallas import tpu as pltpu

# ---------------- config (small, consistent with the module) ----------------
VOCAB_SIZE = 50
EMBEDDING_DIM = 16
HIDDEN_DIM = 32
OUTPUT_DIM = 4
N_LAYERS = 2
BIDIRECTIONAL = False   # must be False for Attention's Linear(2H, H) to match
DROPOUT = 0.0           # eval-mode semantics
PAD_IDX = 0
BATCH = 8
SEQ_LEN = 8             # must equal BATCH for the (buggy-but-faithful) concat/bmm

assert BATCH == SEQ_LEN, "torch module's Attention/bmm is only shape-valid for B == S"
assert 4 * HIDDEN_DIM == 128, "gate block assumed to be exactly 128 lanes"
assert VOCAB_SIZE <= 128, "one-hot embedding matmul assumes vocab fits in 128 lanes"

# ---- row offsets inside the 128-lane weight slab (all 8-aligned) ----
_ROW_WAO = 128
_ROW_WAH = 160
_ROW_WFC = 192
_ROW_BA = 224
_ROW_V = 232
_ROW_BFC = 240
_SLAB_A_ROWS = 248
_SLAB_B_ROWS = 72


# ----------------------------- fused forward kernel -----------------------------
def _fused_forward_kernel(ids_ref, wa_ref, wb_ref, pred_ref):
    S, B, H = SEQ_LEN, BATCH, HIDDEN_DIM
    f32 = jnp.float32

    # ---- unpack weight slabs (static ref slices; offsets 8/128-aligned) ----
    tab_w0b = wa_ref[0:128, :]                           # [128, 4H] embed @ Wih0^T + b0
    wao = wa_ref[_ROW_WAO:_ROW_WAO + H, 0:H]             # attention: outputs half
    wah = wa_ref[_ROW_WAH:_ROW_WAH + H, 0:H]             # attention: hidden half
    wfc = wa_ref[_ROW_WFC:_ROW_WFC + H, :]               # [H, 128] zero-padded FC weight
    ba = wa_ref[_ROW_BA:_ROW_BA + 1, 0:H]                # [1, H]
    v = wa_ref[_ROW_V:_ROW_V + 1, 0:H]                   # [1, H]
    bfc = wa_ref[_ROW_BFC:_ROW_BFC + 1, :]               # [1, 128] zero-padded FC bias
    w_rec = wb_ref[0:2 * H, :]                           # [[w0h | w1x], [0 | w1h]] -> [2H, 8H]
    b1 = wb_ref[2 * H:2 * H + 1, 4 * H:8 * H]            # [1, 4H]

    # ---- embedding gather as a one-hot matmul (layer-0 input gates + b0 folded in) ----
    ids = ids_ref[...]                                                 # [S*B, 1] i32 (time-major)
    lane = jax.lax.broadcasted_iota(jnp.int32, (S * B, 128), 1)
    onehot = (lane == ids).astype(f32)                                 # [S*B, 128]
    xw0b = jnp.dot(onehot, tab_w0b, preferred_element_type=f32)        # [S*B, 4H]

    # ---- LSTM cell: full-width activations, then 32-lane gate slices (i|f|g|o) ----
    def cell(gates, c):
        sg = jax.nn.sigmoid(gates)
        th = jnp.tanh(gates)
        c_new = sg[:, H:2 * H] * c + sg[:, 0:H] * th[:, 2 * H:3 * H]
        h_new = sg[:, 3 * H:4 * H] * jnp.tanh(c_new)
        return h_new, c_new

    # ---- both LSTM layers as ONE software-pipelined recurrence:
    #      combined step t runs layer-0 time t and layer-1 time t-1; layer-1's input
    #      at time t-1 is exactly the current h0 (layer-0's output at t-1). ----
    h0 = jnp.zeros((B, H), f32); c0 = jnp.zeros((B, H), f32)
    h1 = jnp.zeros((B, H), f32); c1 = jnp.zeros((B, H), f32)
    outs1 = []
    for t in range(S + 1):                      # static unroll, 9 combined steps
        if t > 0:
            lhs = jnp.concatenate([h0, h1], axis=1)                       # [B, 2H]
            fused = jnp.dot(lhs, w_rec, preferred_element_type=f32)       # [B, 8H]
            h1, c1 = cell(fused[:, 4 * H:8 * H] + b1, c1)                 # layer-1, time t-1
            outs1.append(h1)
        if t < S:                                                          # layer-0, time t
            g0 = xw0b[t * B:(t + 1) * B, :]
            if t > 0:
                g0 = g0 + fused[:, 0:4 * H]
            h0, c0 = cell(g0, c0)

    # ---- additive attention, kept 2-D (torch-faithful: hidden half indexed by TIME,
    #      only shape-valid because S == B) ----
    hid = outs1[-1]                                                    # hidden[-1]   [B, H]
    outs1_flat = jnp.concatenate(outs1, axis=0)                        # [S*B, H]
    a_hid = jnp.dot(hid, wah, preferred_element_type=f32) + ba         # [B, H] (row s = time s)
    a_out = jnp.dot(outs1_flat, wao, preferred_element_type=f32)       # [S*B, H]

    cols = []
    for s in range(S):
        e_s = jnp.tanh(a_out[s * B:(s + 1) * B, :] + a_hid[s:s + 1, :])   # [B, H]
        cols.append(jnp.sum(e_s * v, axis=1, keepdims=True))              # logits[s, :] as column
    logits_t = jnp.concatenate(cols, axis=1)                           # [B, S] == logits[s,b]^T

    # softmax over torch dim=1 (the b axis == sublanes here), exact divide
    m = jnp.max(logits_t, axis=0, keepdims=True)
    e = jnp.exp(logits_t - m)
    attn = jnp.transpose(e / jnp.sum(e, axis=0, keepdims=True))        # attention[i, j]  [S, B]

    # weighted[i, :] = sum_j attention[i, j] * outs1[j][i, :]   (torch bmm, S == B)
    weighted = jnp.zeros((B, H), f32)
    for j in range(S):
        weighted = weighted + attn[:, j:j + 1] * outs1[j]

    # lane-dense FC (wfc / bfc zero-padded to 128 lanes); wrapper slices [:, :OUTPUT_DIM]
    pred_ref[...] = jnp.dot(weighted, wfc, preferred_element_type=f32) + bfc


# ------------------------- one-time weight packing (hoisted) -------------------------
def pack_params(params):
    H, E, O = HIDDEN_DIM, EMBEDDING_DIM, OUTPUT_DIM
    f32 = jnp.float32

    Wih0, Whh0, bih0, bhh0 = params["lstm"][0]
    Wih1, Whh1, bih1, bhh1 = params["lstm"][1]
    w0x = jnp.transpose(Wih0).astype(f32)                 # [E, 4H] (gate cols i|f|g|o)
    w0h = jnp.transpose(Whh0).astype(f32)                 # [H, 4H]
    w1x = jnp.transpose(Wih1).astype(f32)                 # [H, 4H]
    w1h = jnp.transpose(Whh1).astype(f32)                 # [H, 4H]
    b0 = (bih0 + bhh0).reshape(1, 4 * H).astype(f32)
    b1 = (bih1 + bhh1).reshape(1, 4 * H).astype(f32)

    # embedding table (padded to 128 rows) pre-multiplied by layer-0 input weight,
    # b0 folded in (each one-hot row sums to exactly 1).
    emb_pad = jnp.zeros((128, E), f32).at[:VOCAB_SIZE, :].set(params["embedding"].astype(f32))
    tab_w0b = emb_pad @ w0x + b0                          # [128, 4H]

    # block-structured recurrent weight:  [h0 | h1] @ [[w0h | w1x], [0 | w1h]]
    w_rec = jnp.zeros((2 * H, 8 * H), f32)
    w_rec = w_rec.at[0:H, 0:4 * H].set(w0h)
    w_rec = w_rec.at[0:H, 4 * H:8 * H].set(w1x)
    w_rec = w_rec.at[H:2 * H, 4 * H:8 * H].set(w1h)

    slab_b = jnp.zeros((_SLAB_B_ROWS, 8 * H), f32)
    slab_b = slab_b.at[0:2 * H, :].set(w_rec)
    slab_b = slab_b.at[2 * H:2 * H + 1, 4 * H:8 * H].set(b1)

    wao = jnp.transpose(params["attn_w"][:, :H]).astype(f32)   # outputs half [H, H]
    wah = jnp.transpose(params["attn_w"][:, H:]).astype(f32)   # hidden half  [H, H]
    ba = params["attn_b"].reshape(1, H).astype(f32)
    v = params["v_w"].reshape(1, H).astype(f32)
    wfc = jnp.transpose(params["fc_w"]).astype(f32)             # [H, O]
    bfc = params["fc_b"].reshape(1, O).astype(f32)

    slab_a = jnp.zeros((_SLAB_A_ROWS, 4 * H), f32)
    slab_a = slab_a.at[0:128, :].set(tab_w0b)
    slab_a = slab_a.at[_ROW_WAO:_ROW_WAO + H, 0:H].set(wao)
    slab_a = slab_a.at[_ROW_WAH:_ROW_WAH + H, 0:H].set(wah)
    slab_a = slab_a.at[_ROW_WFC:_ROW_WFC + H, 0:O].set(wfc)
    slab_a = slab_a.at[_ROW_BA:_ROW_BA + 1, 0:H].set(ba)
    slab_a = slab_a.at[_ROW_V:_ROW_V + 1, 0:H].set(v)
    slab_a = slab_a.at[_ROW_BFC:_ROW_BFC + 1, 0:O].set(bfc)
    return slab_a, slab_b


# ------------------------------- full forward -------------------------------
def text_attn_model_forward(text, packed):
    slab_a, slab_b = packed
    B, S = text.shape
    assert B == BATCH and S == SEQ_LEN and B == S

    # time-major flat token ids: row s*B + b  ==  text[b, s]
    ids_tm = jnp.transpose(text).reshape(S * B, 1).astype(jnp.int32)

    pred_pad = pl.pallas_call(
        _fused_forward_kernel,
        out_shape=jax.ShapeDtypeStruct((B, 128), jnp.float32),
        grid=(1,),
        in_specs=[
            pl.BlockSpec((S * B, 1), lambda i: (0, 0)),
            pl.BlockSpec((_SLAB_A_ROWS, 128), lambda i: (0, 0)),
            pl.BlockSpec((_SLAB_B_ROWS, 256), lambda i: (0, 0)),
        ],
        out_specs=pl.BlockSpec((B, 128), lambda i: (0, 0)),
        compiler_params=pltpu.CompilerParams(dimension_semantics=("arbitrary",)),
    )(ids_tm, slab_a, slab_b)
    return pred_pad[:, :OUTPUT_DIM]


# -------------------------- pure-JAX reference check --------------------------
def reference_forward(text, params):
    H = HIDDEN_DIM
    emb = params["embedding"][text]
    x = jnp.transpose(emb, (1, 0, 2)).astype(jnp.float32)
    for layer in range(N_LAYERS):
        Wih, Whh, bih, bhh = params["lstm"][layer]
        S, B, _ = x.shape
        h = jnp.zeros((B, H), jnp.float32)
        c = jnp.zeros((B, H), jnp.float32)
        outs = []
        for t in range(S):
            g = x[t] @ Wih.T + h @ Whh.T + bih + bhh
            i_g = jax.nn.sigmoid(g[:, :H]); f_g = jax.nn.sigmoid(g[:, H:2 * H])
            g_g = jnp.tanh(g[:, 2 * H:3 * H]); o_g = jax.nn.sigmoid(g[:, 3 * H:])
            c = f_g * c + i_g * g_g
            h = o_g * jnp.tanh(c)
            outs.append(h)
        x = jnp.stack(outs, axis=0)
    outputs = x
    hidden_last = outputs[-1]
    S, B, _ = outputs.shape
    hid_rep = jnp.broadcast_to(hidden_last[:, None, :], (B, S, H))
    cat = jnp.concatenate([outputs, hid_rep], axis=2)      # valid only because S == B
    energy = jnp.tanh(cat @ params["attn_w"].T + params["attn_b"])
    logits = (energy @ params["v_w"].T)[..., 0]
    attn = jax.nn.softmax(logits, axis=1)
    weighted = jnp.einsum("ij,jih->ih", attn, outputs)
    return weighted @ params["fc_w"].T + params["fc_b"]


# ------------------------------- param init ---------------------------------
def init_params(key):
    keys = jax.random.split(key, 16)

    def rnd(k, shape, scale=0.1):
        return jax.random.normal(k, shape, jnp.float32) * scale

    emb = rnd(keys[0], (VOCAB_SIZE, EMBEDDING_DIM), 0.5)
    emb = emb.at[PAD_IDX].set(0.0)   # nn.Embedding padding_idx row is zero

    lstm, kidx = [], 1
    for layer in range(N_LAYERS):
        in_dim = EMBEDDING_DIM if layer == 0 else HIDDEN_DIM
        Wih = rnd(keys[kidx], (4 * HIDDEN_DIM, in_dim)); kidx += 1
        Whh = rnd(keys[kidx], (4 * HIDDEN_DIM, HIDDEN_DIM)); kidx += 1
        bih = rnd(keys[kidx], (4 * HIDDEN_DIM,)); kidx += 1
        bhh = rnd(keys[kidx], (4 * HIDDEN_DIM,)); kidx += 1
        lstm.append((Wih, Whh, bih, bhh))

    attn_w = rnd(keys[kidx], (HIDDEN_DIM, 2 * HIDDEN_DIM)); kidx += 1
    attn_b = rnd(keys[kidx], (HIDDEN_DIM,)); kidx += 1
    v_w = rnd(keys[kidx], (1, HIDDEN_DIM)); kidx += 1
    fc_w = rnd(keys[kidx], (OUTPUT_DIM, HIDDEN_DIM)); kidx += 1
    fc_b = rnd(keys[kidx], (OUTPUT_DIM,)); kidx += 1
    return {"embedding": emb, "lstm": lstm, "attn_w": attn_w, "attn_b": attn_b,
            "v_w": v_w, "fc_w": fc_w, "fc_b": fc_b}


if __name__ == "__main__":
    key = jax.random.PRNGKey(0)
    pkey, tkey = jax.random.split(key)
    params = init_params(pkey)
    packed = pack_params(params)            # hoisted: done once, not per forward

    text = jax.random.randint(tkey, (BATCH, SEQ_LEN), 0, VOCAB_SIZE, dtype=jnp.int32)
    text = text.at[:, -1].set(PAD_IDX)      # a few padding tokens

    fwd = jax.jit(text_attn_model_forward)
    pred = jax.block_until_ready(fwd(text, packed))

    ref = jax.block_until_ready(reference_forward(text, params))
    max_err = float(jnp.max(jnp.abs(pred - ref)))
    assert pred.shape == (BATCH, OUTPUT_DIM)
    assert max_err < 2e-3, f"mismatch vs reference: {max_err}"

    print("KERNEL_OK")
</pallas_src>

<mosaic_0001>
module attributes {stable_mosaic.version = 11 : i64} {
  func.func @_fused_forward_kernel(%arg0: i32, %arg1: memref<64x1xi32, #tpu.memory_space<vmem>>, %arg2: memref<248x128xf32, #tpu.memory_space<vmem>>, %arg3: memref<72x256xf32, #tpu.memory_space<vmem>>, %arg4: memref<8x128xf32, #tpu.memory_space<vmem>>) attributes {dimension_semantics = [#tpu.dimension_semantics<arbitrary>], iteration_bounds = array<i64: 1>, scalar_prefetch = 0 : i64, scratch_operands = 0 : i64, tpu.core_type = #tpu.core_type<tc>, window_params = [{pipeline_mode = #tpu.pipeline_mode<synchronous>, transform_indices = @transform_0, window_bounds = array<i64: 64, 1>}, {pipeline_mode = #tpu.pipeline_mode<synchronous>, transform_indices = @transform_1, window_bounds = array<i64: 248, 128>}, {pipeline_mode = #tpu.pipeline_mode<synchronous>, transform_indices = @transform_2, window_bounds = array<i64: 72, 256>}, {pipeline_mode = #tpu.pipeline_mode<synchronous>, transform_indices = @transform_3, window_bounds = array<i64: 8, 128>}]} {
    %c0 = arith.constant 0 : index
    %c0_0 = arith.constant 0 : index
    %0 = vector.load %arg2[%c0, %c0_0] : memref<248x128xf32, #tpu.memory_space<vmem>>, vector<128x128xf32>
    %c128 = arith.constant 128 : index
    %c0_1 = arith.constant 0 : index
    %1 = vector.load %arg2[%c128, %c0_1] : memref<248x128xf32, #tpu.memory_space<vmem>>, vector<32x32xf32>
    %c160 = arith.constant 160 : index
    %c0_2 = arith.constant 0 : index
    %2 = vector.load %arg2[%c160, %c0_2] : memref<248x128xf32, #tpu.memory_space<vmem>>, vector<32x32xf32>
    %c192 = arith.constant 192 : index
    %c0_3 = arith.constant 0 : index
    %3 = vector.load %arg2[%c192, %c0_3] : memref<248x128xf32, #tpu.memory_space<vmem>>, vector<32x128xf32>
    %c224 = arith.constant 224 : index
    %c0_4 = arith.constant 0 : index
    %4 = vector.load %arg2[%c224, %c0_4] : memref<248x128xf32, #tpu.memory_space<vmem>>, vector<1x32xf32>
    %c232 = arith.constant 232 : index
    %c0_5 = arith.constant 0 : index
    %5 = vector.load %arg2[%c232, %c0_5] : memref<248x128xf32, #tpu.memory_space<vmem>>, vector<1x32xf32>
    %c240 = arith.constant 240 : index
    %c0_6 = arith.constant 0 : index
    %6 = vector.load %arg2[%c240, %c0_6] : memref<248x128xf32, #tpu.memory_space<vmem>>, vector<1x128xf32>
    %c0_7 = arith.constant 0 : index
    %c0_8 = arith.constant 0 : index
    %7 = vector.load %arg3[%c0_7, %c0_8] : memref<72x256xf32, #tpu.memory_space<vmem>>, vector<64x256xf32>
    %c64 = arith.constant 64 : index
    %c128_9 = arith.constant 128 : index
    %8 = vector.load %arg3[%c64, %c128_9] : memref<72x256xf32, #tpu.memory_space<vmem>>, vector<1x128xf32>
    %c0_10 = arith.constant 0 : index
    %c0_11 = arith.constant 0 : index
    %9 = vector.load %arg1[%c0_10, %c0_11] : memref<64x1xi32, #tpu.memory_space<vmem>>, vector<64x1xi32>
    %10 = tpu.iota {dimensions = array<i32: 1>} : vector<64x128xi32>
    %11 = vector.broadcast %9 : vector<64x1xi32> to vector<64x128xi32>
    %12 = arith.cmpi eq, %10, %11 : vector<64x128xi32>
    %13 = arith.extui %12 : vector<64x128xi1> to vector<64x128xi32>
    %14 = arith.sitofp %13 : vector<64x128xi32> to vector<64x128xf32>
    %cst = arith.constant dense<0.000000e+00> : vector<64x128xf32>
    %15 = tpu.matmul %14, %0, %cst {dimension_numbers = #tpu.dot_dimension_numbers<[1], [0], [0], [1], [0, 0, 1, 1], [], []>} : vector<64x128xf32>, vector<128x128xf32>, vector<64x128xf32> -> vector<64x128xf32>
    %cst_12 = arith.constant 0.000000e+00 : f32
    %16 = vector.broadcast %cst_12 : f32 to vector<8x32xf32>
    %cst_13 = arith.constant 0.000000e+00 : f32
    %17 = vector.broadcast %cst_13 : f32 to vector<8x32xf32>
    %cst_14 = arith.constant 0.000000e+00 : f32
    %18 = vector.broadcast %cst_14 : f32 to vector<8x32xf32>
    %19 = vector.extract_strided_slice %15 {offsets = [0, 0], sizes = [8, 128], strides = [1, 1]} : vector<64x128xf32> to vector<8x128xf32>
    %20 = arith.negf %19 : vector<8x128xf32>
    %21 = math.exp %20 : vector<8x128xf32>
    %cst_15 = arith.constant 1.000000e+00 : f32
    %22 = vector.broadcast %cst_15 : f32 to vector<8x128xf32>
    %23 = arith.addf %22, %21 : vector<8x128xf32>
    %24 = arith.divf %22, %23 : vector<8x128xf32>
    %25 = math.tanh %19 : vector<8x128xf32>
    %26 = vector.extract_strided_slice %24 {offsets = [0, 32], sizes = [8, 32], strides = [1, 1]} : vector<8x128xf32> to vector<8x32xf32>
    %27 = arith.mulf %26, %16 : vector<8x32xf32>
    %28 = vector.extract_strided_slice %24 {offsets = [0, 0], sizes = [8, 32], strides = [1, 1]} : vector<8x128xf32> to vector<8x32xf32>
    %29 = vector.extract_strided_slice %25 {offsets = [0, 64], sizes = [8, 32], strides = [1, 1]} : vector<8x128xf32> to vector<8x32xf32>
    %30 = arith.mulf %28, %29 : vector<8x32xf32>
    %31 = arith.addf %27, %30 : vector<8x32xf32>
    %32 = vector.extract_strided_slice %24 {offsets = [0, 96], sizes = [8, 32], strides = [1, 1]} : vector<8x128xf32> to vector<8x32xf32>
    %33 = math.tanh %31 : vector<8x32xf32>
    %34 = arith.mulf %32, %33 : vector<8x32xf32>
    %35 = tpu.concatenate %34, %17 in 1 : vector<8x32xf32>, vector<8x32xf32> -> vector<8x64xf32>
    %cst_16 = arith.constant dense<0.000000e+00> : vector<8x256xf32>
    %36 = tpu.matmul %35, %7, %cst_16 {dimension_numbers = #tpu.dot_dimension_numbers<[1], [0], [0], [1], [0, 0, 1, 1], [], []>} : vector<8x64xf32>, vector<64x256xf32>, vector<8x256xf32> -> vector<8x256xf32>
    %37 = vector.extract_strided_slice %36 {offsets = [0, 128], sizes = [8, 128], strides = [1, 1]} : vector<8x256xf32> to vector<8x128xf32>
    %38 = vector.broadcast %8 : vector<1x128xf32> to vector<8x128xf32>
    %39 = arith.addf %37, %38 : vector<8x128xf32>
    %40 = arith.negf %39 : vector<8x128xf32>
    %41 = math.exp %40 : vector<8x128xf32>
    %cst_17 = arith.constant 1.000000e+00 : f32
    %42 = vector.broadcast %cst_17 : f32 to vector<8x128xf32>
    %43 = arith.addf %42, %41 : vector<8x128xf32>
    %44 = arith.divf %42, %43 : vector<8x128xf32>
    %45 = math.tanh %39 : vector<8x128xf32>
    %46 = vector.extract_strided_slice %44 {offsets = [0, 32], sizes = [8, 32], strides = [1, 1]} : vector<8x128xf32> to vector<8x32xf32>
    %47 = arith.mulf %46, %18 : vector<8x32xf32>
    %48 = vector.extract_strided_slice %44 {offsets = [0, 0], sizes = [8, 32], strides = [1, 1]} : vector<8x128xf32> to vector<8x32xf32>
    %49 = vector.extract_strided_slice %45 {offsets = [0, 64], sizes = [8, 32], strides = [1, 1]} : vector<8x128xf32> to vector<8x32xf32>
    %50 = arith.mulf %48, %49 : vector<8x32xf32>
    %51 = arith.addf %47, %50 : vector<8x32xf32>
    %52 = vector.extract_strided_slice %44 {offsets = [0, 96], sizes = [8, 32], strides = [1, 1]} : vector<8x128xf32> to vector<8x32xf32>
    %53 = math.tanh %51 : vector<8x32xf32>
    %54 = arith.mulf %52, %53 : vector<8x32xf32>
    %55 = vector.extract_strided_slice %15 {offsets = [8, 0], sizes = [8, 128], strides = [1, 1]} : vector<64x128xf32> to vector<8x128xf32>
    %56 = vector.extract_strided_slice %36 {offsets = [0, 0], sizes = [8, 128], strides = [1, 1]} : vector<8x256xf32> to vector<8x128xf32>
    %57 = arith.addf %55, %56 : vector<8x128xf32>
    %58 = arith.negf %57 : vector<8x128xf32>
    %59 = math.exp %58 : vector<8x128xf32>
    %cst_18 = arith.constant 1.000000e+00 : f32
    %60 = vector.broadcast %cst_18 : f32 to vector<8x128xf32>
    %61 = arith.addf %60, %59 : vector<8x128xf32>
    %62 = arith.divf %60, %61 : vector<8x128xf32>
    %63 = math.tanh %57 : vector<8x128xf32>
    %64 = vector.extract_strided_slice %62 {offsets = [0, 32], sizes = [8, 32], strides = [1, 1]} : vector<8x128xf32> to vector<8x32xf32>
    %65 = arith.mulf %64, %31 : vector<8x32xf32>
    %66 = vector.extract_strided_slice %62 {offsets = [0, 0], sizes = [8, 32], strides = [1, 1]} : vector<8x128xf32> to vector<8x32xf32>
    %67 = vector.extract_strided_slice %63 {offsets = [0, 64], sizes = [8, 32], strides = [1, 1]} : vector<8x128xf32> to vector<8x32xf32>
    %68 = arith.mulf %66, %67 : vector<8x32xf32>
    %69 = arith.addf %65, %68 : vector<8x32xf32>
    %70 = vector.extract_strided_slice %62 {offsets = [0, 96], sizes = [8, 32], strides = [1, 1]} : vector<8x128xf32> to vector<8x32xf32>
    %71 = math.tanh %69 : vector<8x32xf32>
    %72 = arith.mulf %70, %71 : vector<8x32xf32>
    %73 = tpu.concatenate %72, %54 in 1 : vector<8x32xf32>, vector<8x32xf32> -> vector<8x64xf32>
    %cst_19 = arith.constant dense<0.000000e+00> : vector<8x256xf32>
    %74 = tpu.matmul %73, %7, %cst_19 {dimension_numbers = #tpu.dot_dimension_numbers<[1], [0], [0], [1], [0, 0, 1, 1], [], []>} : vector<8x64xf32>, vector<64x256xf32>, vector<8x256xf32> -> vector<8x256xf32>
    %75 = vector.extract_strided_slice %74 {offsets = [0, 128], sizes = [8, 128], strides = [1, 1]} : vector<8x256xf32> to vector<8x128xf32>
    %76 = vector.broadcast %8 : vector<1x128xf32> to vector<8x128xf32>
    %77 = arith.addf %75, %76 : vector<8x128xf32>
    %78 = arith.negf %77 : vector<8x128xf32>
    %79 = math.exp %78 : vector<8x128xf32>
    %cst_20 = arith.constant 1.000000e+00 : f32
    %80 = vector.broadcast %cst_20 : f32 to vector<8x128xf32>
    %81 = arith.addf %80, %79 : vector<8x128xf32>
    %82 = arith.divf %80, %81 : vector<8x128xf32>
    %83 = math.tanh %77 : vector<8x128xf32>
    %84 = vector.extract_strided_slice %82 {offsets = [0, 32], sizes = [8, 32], strides = [1, 1]} : vector<8x128xf32> to vector<8x32xf32>
    %85 = arith.mulf %84, %51 : vector<8x32xf32>
    %86 = vector.extract_strided_slice %82 {offsets = [0, 0], sizes = [8, 32], strides = [1, 1]} : vector<8x128xf32> to vector<8x32xf32>
    %87 = vector.extract_strided_slice %83 {offsets = [0, 64], sizes = [8, 32], strides = [1, 1]} : vector<8x128xf32> to vector<8x32xf32>
    %88 = arith.mulf %86, %87 : vector<8x32xf32>
    %89 = arith.addf %85, %88 : vector<8x32xf32>
    %90 = vector.extract_strided_slice %82 {offsets = [0, 96], sizes = [8, 32], strides = [1, 1]} : vector<8x128xf32> to vector<8x32xf32>
    %91 = math.tanh %89 : vector<8x32xf32>
    %92 = arith.mulf %90, %91 : vector<8x32xf32>
    %93 = vector.extract_strided_slice %15 {offsets = [16, 0], sizes = [8, 128], strides = [1, 1]} : vector<64x128xf32> to vector<8x128xf32>
    %94 = vector.extract_strided_slice %74 {offsets = [0, 0], sizes = [8, 128], strides = [1, 1]} : vector<8x256xf32> to vector<8x128xf32>
    %95 = arith.addf %93, %94 : vector<8x128xf32>
    %96 = arith.negf %95 : vector<8x128xf32>
    %97 = math.exp %96 : vector<8x128xf32>
    %cst_21 = arith.constant 1.000000e+00 : f32
    %98 = vector.broadcast %cst_21 : f32 to vector<8x128xf32>
    %99 = arith.addf %98, %97 : vector<8x128xf32>
    %100 = arith.divf %98, %99 : vector<8x128xf32>
    %101 = math.tanh %95 : vector<8x128xf32>
    %102 = vector.extract_strided_slice %100 {offsets = [0, 32], sizes = [8, 32], strides = [1, 1]} : vector<8x128xf32> to vector<8x32xf32>
    %103 = arith.mulf %102, %69 : vector<8x32xf32>
    %104 = vector.extract_strided_slice %100 {offsets = [0, 0], sizes = [8, 32], strides = [1, 1]} : vector<8x128xf32> to vector<8x32xf32>
    %105 = vector.extract_strided_slice %101 {offsets = [0, 64], sizes = [8, 32], strides = [1, 1]} : vector<8x128xf32> to vector<8x32xf32>
    %106 = arith.mulf %104, %105 : vector<8x32xf32>
    %107 = arith.addf %103, %106 : vector<8x32xf32>
    %108 = vector.extract_strided_slice %100 {offsets = [0, 96], sizes = [8, 32], strides = [1, 1]} : vector<8x128xf32> to vector<8x32xf32>
    %109 = math.tanh %107 : vector<8x32xf32>
    %110 = arith.mulf %108, %109 : vector<8x32xf32>
    %111 = tpu.concatenate %110, %92 in 1 : vector<8x32xf32>, vector<8x32xf32> -> vector<8x64xf32>
    %cst_22 = arith.constant dense<0.000000e+00> : vector<8x256xf32>
    %112 = tpu.matmul %111, %7, %cst_22 {dimension_numbers = #tpu.dot_dimension_numbers<[1], [0], [0], [1], [0, 0, 1, 1], [], []>} : vector<8x64xf32>, vector<64x256xf32>, vector<8x256xf32> -> vector<8x256xf32>
    %113 = vector.extract_strided_slice %112 {offsets = [0, 128], sizes = [8, 128], strides = [1, 1]} : vector<8x256xf32> to vector<8x128xf32>
    %114 = vector.broadcast %8 : vector<1x128xf32> to vector<8x128xf32>
    %115 = arith.addf %113, %114 : vector<8x128xf32>
    %116 = arith.negf %115 : vector<8x128xf32>
    %117 = math.exp %116 : vector<8x128xf32>
    %cst_23 = arith.constant 1.000000e+00 : f32
    %118 = vector.broadcast %cst_23 : f32 to vector<8x128xf32>
    %119 = arith.addf %118, %117 : vector<8x128xf32>
    %120 = arith.divf %118, %119 : vector<8x128xf32>
    %121 = math.tanh %115 : vector<8x128xf32>
    %122 = vector.extract_strided_slice %120 {offsets = [0, 32], sizes = [8, 32], strides = [1, 1]} : vector<8x128xf32> to vector<8x32xf32>
    %123 = arith.mulf %122, %89 : vector<8x32xf32>
    %124 = vector.extract_strided_slice %120 {offsets = [0, 0], sizes = [8, 32], strides = [1, 1]} : vector<8x128xf32> to vector<8x32xf32>
    %125 = vector.extract_strided_slice %121 {offsets = [0, 64], sizes = [8, 32], strides = [1, 1]} : vector<8x128xf32> to vector<8x32xf32>
    %126 = arith.mulf %124, %125 : vector<8x32xf32>
    %127 = arith.addf %123, %126 : vector<8x32xf32>
    %128 = vector.extract_strided_slice %120 {offsets = [0, 96], sizes = [8, 32], strides = [1, 1]} : vector<8x128xf32> to vector<8x32xf32>
    %129 = math.tanh %127 : vector<8x32xf32>
    %130 = arith.mulf %128, %129 : vector<8x32xf32>
    %131 = vector.extract_strided_slice %15 {offsets = [24, 0], sizes = [8, 128], strides = [1, 1]} : vector<64x128xf32> to vector<8x128xf32>
    %132 = vector.extract_strided_slice %112 {offsets = [0, 0], sizes = [8, 128], strides = [1, 1]} : vector<8x256xf32> to vector<8x128xf32>
    %133 = arith.addf %131, %132 : vector<8x128xf32>
    %134 = arith.negf %133 : vector<8x128xf32>
    %135 = math.exp %134 : vector<8x128xf32>
    %cst_24 = arith.constant 1.000000e+00 : f32
    %136 = vector.broadcast %cst_24 : f32 to vector<8x128xf32>
    %137 = arith.addf %136, %135 : vector<8x128xf32>
    %138 = arith.divf %136, %137 : vector<8x128xf32>
    %139 = math.tanh %133 : vector<8x128xf32>
    %140 = vector.extract_strided_slice %138 {offsets = [0, 32], sizes = [8, 32], strides = [1, 1]} : vector<8x128xf32> to vector<8x32xf32>
    %141 = arith.mulf %140, %107 : vector<8x32xf32>
    %142 = vector.extract_strided_slice %138 {offsets = [0, 0], sizes = [8, 32], strides = [1, 1]} : vector<8x128xf32> to vector<8x32xf32>
    %143 = vector.extract_strided_slice %139 {offsets = [0, 64], sizes = [8, 32], strides = [1, 1]} : vector<8x128xf32> to vector<8x32xf32>
    %144 = arith.mulf %142, %143 : vector<8x32xf32>
    %145 = arith.addf %141, %144 : vector<8x32xf32>
    %146 = vector.extract_strided_slice %138 {offsets = [0, 96], sizes = [8, 32], strides = [1, 1]} : vector<8x128xf32> to vector<8x32xf32>
    %147 = math.tanh %145 : vector<8x32xf32>
    %148 = arith.mulf %146, %147 : vector<8x32xf32>
    %149 = tpu.concatenate %148, %130 in 1 : vector<8x32xf32>, vector<8x32xf32> -> vector<8x64xf32>
    %cst_25 = arith.constant dense<0.000000e+00> : vector<8x256xf32>
    %150 = tpu.matmul %149, %7, %cst_25 {dimension_numbers = #tpu.dot_dimension_numbers<[1], [0], [0], [1], [0, 0, 1, 1], [], []>} : vector<8x64xf32>, vector<64x256xf32>, vector<8x256xf32> -> vector<8x256xf32>
    %151 = vector.extract_strided_slice %150 {offsets = [0, 128], sizes = [8, 128], strides = [1, 1]} : vector<8x256xf32> to vector<8x128xf32>
    %152 = vector.broadcast %8 : vector<1x128xf32> to vector<8x128xf32>
    %153 = arith.addf %151, %152 : vector<8x128xf32>
    %154 = arith.negf %153 : vector<8x128xf32>
    %155 = math.exp %154 : vector<8x128xf32>
    %cst_26 = arith.constant 1.000000e+00 : f32
    %156 = vector.broadcast %cst_26 : f32 to vector<8x128xf32>
    %157 = arith.addf %156, %155 : vector<8x128xf32>
    %158 = arith.divf %156, %157 : vector<8x128xf32>
    %159 = math.tanh %153 : vector<8x128xf32>
    %160 = vector.extract_strided_slice %158 {offsets = [0, 32], sizes = [8, 32], strides = [1, 1]} : vector<8x128xf32> to vector<8x32xf32>
    %161 = arith.mulf %160, %127 : vector<8x32xf32>
    %162 = vector.extract_strided_slice %158 {offsets = [0, 0], sizes = [8, 32], strides = [1, 1]} : vector<8x128xf32> to vector<8x32xf32>
    %163 = vector.extract_strided_slice %159 {offsets = [0, 64], sizes = [8, 32], strides = [1, 1]} : vector<8x128xf32> to vector<8x32xf32>
    %164 = arith.mulf %162, %163 : vector<8x32xf32>
    %165 = arith.addf %161, %164 : vector<8x32xf32>
    %166 = vector.extract_strided_slice %158 {offsets = [0, 96], sizes = [8, 32], strides = [1, 1]} : vector<8x128xf32> to vector<8x32xf32>
    %167 = math.tanh %165 : vector<8x32xf32>
    %168 = arith.mulf %166, %167 : vector<8x32xf32>
    %169 = vector.extract_strided_slice %15 {offsets = [32, 0], sizes = [8, 128], strides = [1, 1]} : vector<64x128xf32> to vector<8x128xf32>
    %170 = vector.extract_strided_slice %150 {offsets = [0, 0], sizes = [8, 128], strides = [1, 1]} : vector<8x256xf32> to vector<8x128xf32>
    %171 = arith.addf %169, %170 : vector<8x128xf32>
    %172 = arith.negf %171 : vector<8x128xf32>
    %173 = math.exp %172 : vector<8x128xf32>
    %cst_27 = arith.constant 1.000000e+00 : f32
    %174 = vector.broadcast %cst_27 : f32 to vector<8x128xf32>
    %175 = arith.addf %174, %173 : vector<8x128xf32>
    %176 = arith.divf %174, %175 : vector<8x128xf32>
    %177 = math.tanh %171 : vector<8x128xf32>
    %178 = vector.extract_strided_slice %176 {offsets = [0, 32], sizes = [8, 32], strides = [1, 1]} : vector<8x128xf32> to vector<8x32xf32>
    %179 = arith.mulf %178, %145 : vector<8x32xf32>
    %180 = vector.extract_strided_slice %176 {offsets = [0, 0], sizes = [8, 32], strides = [1, 1]} : vector<8x128xf32> to vector<8x32xf32>
    %181 = vector.extract_strided_slice %177 {offsets = [0, 64], sizes = [8, 32], strides = [1, 1]} : vector<8x128xf32> to vector<8x32xf32>
    %182 = arith.mulf %180, %181 : vector<8x32xf32>
    %183 = arith.addf %179, %182 : vector<8x32xf32>
    %184 = vector.extract_strided_slice %176 {offsets = [0, 96], sizes = [8, 32], strides = [1, 1]} : vector<8x128xf32> to vector<8x32xf32>
    %185 = math.tanh %183 : vector<8x32xf32>
    %186 = arith.mulf %184, %185 : vector<8x32xf32>
    %187 = tpu.concatenate %186, %168 in 1 : vector<8x32xf32>, vector<8x32xf32> -> vector<8x64xf32>
    %cst_28 = arith.constant dense<0.000000e+00> : vector<8x256xf32>
    %188 = tpu.matmul %187, %7, %cst_28 {dimension_numbers = #tpu.dot_dimension_numbers<[1], [0], [0], [1], [0, 0, 1, 1], [], []>} : vector<8x64xf32>, vector<64x256xf32>, vector<8x256xf32> -> vector<8x256xf32>
    %189 = vector.extract_strided_slice %188 {offsets = [0, 128], sizes = [8, 128], strides = [1, 1]} : vector<8x256xf32> to vector<8x128xf32>
    %190 = vector.broadcast %8 : vector<1x128xf32> to vector<8x128xf32>
    %191 = arith.addf %189, %190 : vector<8x128xf32>
    %192 = arith.negf %191 : vector<8x128xf32>
    %193 = math.exp %192 : vector<8x128xf32>
    %cst_29 = arith.constant 1.000000e+00 : f32
    %194 = vector.broadcast %cst_29 : f32 to vector<8x128xf32>
    %195 = arith.addf %194, %193 : vector<8x128xf32>
    %196 = arith.divf %194, %195 : vector<8x128xf32>
    %197 = math.tanh %191 : vector<8x128xf32>
    %198 = vector.extract_strided_slice %196 {offsets = [0, 32], sizes = [8, 32], strides = [1, 1]} : vector<8x128xf32> to vector<8x32xf32>
    %199 = arith.mulf %198, %165 : vector<8x32xf32>
    %200 = vector.extract_strided_slice %196 {offsets = [0, 0], sizes = [8, 32], strides = [1, 1]} : vector<8x128xf32> to vector<8x32xf32>
    %201 = vector.extract_strided_slice %197 {offsets = [0, 64], sizes = [8, 32], strides = [1, 1]} : vector<8x128xf32> to vector<8x32xf32>
    %202 = arith.mulf %200, %201 : vector<8x32xf32>
    %203 = arith.addf %199, %202 : vector<8x32xf32>
    %204 = vector.extract_strided_slice %196 {offsets = [0, 96], sizes = [8, 32], strides = [1, 1]} : vector<8x128xf32> to vector<8x32xf32>
    %205 = math.tanh %203 : vector<8x32xf32>
    %206 = arith.mulf %204, %205 : vector<8x32xf32>
    %207 = vector.extract_strided_slice %15 {offsets = [40, 0], sizes = [8, 128], strides = [1, 1]} : vector<64x128xf32> to vector<8x128xf32>
    %208 = vector.extract_strided_slice %188 {offsets = [0, 0], sizes = [8, 128], strides = [1, 1]} : vector<8x256xf32> to vector<8x128xf32>
    %209 = arith.addf %207, %208 : vector<8x128xf32>
    %210 = arith.negf %209 : vector<8x128xf32>
    %211 = math.exp %210 : vector<8x128xf32>
    %cst_30 = arith.constant 1.000000e+00 : f32
    %212 = vector.broadcast %cst_30 : f32 to vector<8x128xf32>
    %213 = arith.addf %212, %211 : vector<8x128xf32>
    %214 = arith.divf %212, %213 : vector<8x128xf32>
    %215 = math.tanh %209 : vector<8x128xf32>
    %216 = vector.extract_strided_slice %214 {offsets = [0, 32], sizes = [8, 32], strides = [1, 1]} : vector<8x128xf32> to vector<8x32xf32>
    %217 = arith.mulf %216, %183 : vector<8x32xf32>
    %218 = vector.extract_strided_slice %214 {offsets = [0, 0], sizes = [8, 32], strides = [1, 1]} : vector<8x128xf32> to vector<8x32xf32>
    %219 = vector.extract_strided_slice %215 {offsets = [0, 64], sizes = [8, 32], strides = [1, 1]} : vector<8x128xf32> to vector<8x32xf32>
    %220 = arith.mulf %218, %219 : vector<8x32xf32>
    %221 = arith.addf %217, %220 : vector<8x32xf32>
    %222 = vector.extract_strided_slice %214 {offsets = [0, 96], sizes = [8, 32], strides = [1, 1]} : vector<8x128xf32> to vector<8x32xf32>
    %223 = math.tanh %221 : vector<8x32xf32>
    %224 = arith.mulf %222, %223 : vector<8x32xf32>
    %225 = tpu.concatenate %224, %206 in 1 : vector<8x32xf32>, vector<8x32xf32> -> vector<8x64xf32>
    %cst_31 = arith.constant dense<0.000000e+00> : vector<8x256xf32>
    %226 = tpu.matmul %225, %7, %cst_31 {dimension_numbers = #tpu.dot_dimension_numbers<[1], [0], [0], [1], [0, 0, 1, 1], [], []>} : vector<8x64xf32>, vector<64x256xf32>, vector<8x256xf32> -> vector<8x256xf32>
    %227 = vector.extract_strided_slice %226 {offsets = [0, 128], sizes = [8, 128], strides = [1, 1]} : vector<8x256xf32> to vector<8x128xf32>
    %228 = vector.broadcast %8 : vector<1x128xf32> to vector<8x128xf32>
    %229 = arith.addf %227, %228 : vector<8x128xf32>
    %230 = arith.negf %229 : vector<8x128xf32>
    %231 = math.exp %230 : vector<8x128xf32>
    %cst_32 = arith.constant 1.000000e+00 : f32
    %232 = vector.broadcast %cst_32 : f32 to vector<8x128xf32>
    %233 = arith.addf %232, %231 : vector<8x128xf32>
    %234 = arith.divf %232, %233 : vector<8x128xf32>
    %235 = math.tanh %229 : vector<8x128xf32>
    %236 = vector.extract_strided_slice %234 {offsets = [0, 32], sizes = [8, 32], strides = [1, 1]} : vector<8x128xf32> to vector<8x32xf32>
    %237 = arith.mulf %236, %203 : vector<8x32xf32>
    %238 = vector.extract_strided_slice %234 {offsets = [0, 0], sizes = [8, 32], strides = [1, 1]} : vector<8x128xf32> to vector<8x32xf32>
    %239 = vector.extract_strided_slice %235 {offsets = [0, 64], sizes = [8, 32], strides = [1, 1]} : vector<8x128xf32> to vector<8x32xf32>
    %240 = arith.mulf %238, %239 : vector<8x32xf32>
    %241 = arith.addf %237, %240 : vector<8x32xf32>
    %242 = vector.extract_strided_slice %234 {offsets = [0, 96], sizes = [8, 32], strides = [1, 1]} : vector<8x128xf32> to vector<8x32xf32>
    %243 = math.tanh %241 : vector<8x32xf32>
    %244 = arith.mulf %242, %243 : vector<8x32xf32>
    %245 = vector.extract_strided_slice %15 {offsets = [48, 0], sizes = [8, 128], strides = [1, 1]} : vector<64x128xf32> to vector<8x128xf32>
    %246 = vector.extract_strided_slice %226 {offsets = [0, 0], sizes = [8, 128], strides = [1, 1]} : vector<8x256xf32> to vector<8x128xf32>
    %247 = arith.addf %245, %246 : vector<8x128xf32>
    %248 = arith.negf %247 : vector<8x128xf32>
    %249 = math.exp %248 : vector<8x128xf32>
    %cst_33 = arith.constant 1.000000e+00 : f32
    %250 = vector.broadcast %cst_33 : f32 to vector<8x128xf32>
    %251 = arith.addf %250, %249 : vector<8x128xf32>
    %252 = arith.divf %250, %251 : vector<8x128xf32>
    %253 = math.tanh %247 : vector<8x128xf32>
    %254 = vector.extract_strided_slice %252 {offsets = [0, 32], sizes = [8, 32], strides = [1, 1]} : vector<8x128xf32> to vector<8x32xf32>
    %255 = arith.mulf %254, %221 : vector<8x32xf32>
    %256 = vector.extract_strided_slice %252 {offsets = [0, 0], sizes = [8, 32], strides = [1, 1]} : vector<8x128xf32> to vector<8x32xf32>
    %257 = vector.extract_strided_slice %253 {offsets = [0, 64], sizes = [8, 32], strides = [1, 1]} : vector<8x128xf32> to vector<8x32xf32>
    %258 = arith.mulf %256, %257 : vector<8x32xf32>
    %259 = arith.addf %255, %258 : vector<8x32xf32>
    %260 = vector.extract_strided_slice %252 {offsets = [0, 96], sizes = [8, 32], strides = [1, 1]} : vector<8x128xf32> to vector<8x32xf32>
    %261 = math.tanh %259 : vector<8x32xf32>
    %262 = arith.mulf %260, %261 : vector<8x32xf32>
    %263 = tpu.concatenate %262, %244 in 1 : vector<8x32xf32>, vector<8x32xf32> -> vector<8x64xf32>
    %cst_34 = arith.constant dense<0.000000e+00> : vector<8x256xf32>
    %264 = tpu.matmul %263, %7, %cst_34 {dimension_numbers = #tpu.dot_dimension_numbers<[1], [0], [0], [1], [0, 0, 1, 1], [], []>} : vector<8x64xf32>, vector<64x256xf32>, vector<8x256xf32> -> vector<8x256xf32>
    %265 = vector.extract_strided_slice %264 {offsets = [0, 128], sizes = [8, 128], strides = [1, 1]} : vector<8x256xf32> to vector<8x128xf32>
    %266 = vector.broadcast %8 : vector<1x128xf32> to vector<8x128xf32>
    %267 = arith.addf %265, %266 : vector<8x128xf32>
    %268 = arith.negf %267 : vector<8x128xf32>
    %269 = math.exp %268 : vector<8x128xf32>
    %cst_35 = arith.constant 1.000000e+00 : f32
    %270 = vector.broadcast %cst_35 : f32 to vector<8x128xf32>
    %271 = arith.addf %270, %269 : vector<8x128xf32>
    %272 = arith.divf %270, %271 : vector<8x128xf32>
    %273 = math.tanh %267 : vector<8x128xf32>
    %274 = vector.extract_strided_slice %272 {offsets = [0, 32], sizes = [8, 32], strides = [1, 1]} : vector<8x128xf32> to vector<8x32xf32>
    %275 = arith.mulf %274, %241 : vector<8x32xf32>
    %276 = vector.extract_strided_slice %272 {offsets = [0, 0], sizes = [8, 32], strides = [1, 1]} : vector<8x128xf32> to vector<8x32xf32>
    %277 = vector.extract_strided_slice %273 {offsets = [0, 64], sizes = [8, 32], strides = [1, 1]} : vector<8x128xf32> to vector<8x32xf32>
    %278 = arith.mulf %276, %277 : vector<8x32xf32>
    %279 = arith.addf %275, %278 : vector<8x32xf32>
    %280 = vector.extract_strided_slice %272 {offsets = [0, 96], sizes = [8, 32], strides = [1, 1]} : vector<8x128xf32> to vector<8x32xf32>
    %281 = math.tanh %279 : vector<8x32xf32>
    %282 = arith.mulf %280, %281 : vector<8x32xf32>
    %283 = vector.extract_strided_slice %15 {offsets = [56, 0], sizes = [8, 128], strides = [1, 1]} : vector<64x128xf32> to vector<8x128xf32>
    %284 = vector.extract_strided_slice %264 {offsets = [0, 0], sizes = [8, 128], strides = [1, 1]} : vector<8x256xf32> to vector<8x128xf32>
    %285 = arith.addf %283, %284 : vector<8x128xf32>
    %286 = arith.negf %285 : vector<8x128xf32>
    %287 = math.exp %286 : vector<8x128xf32>
    %cst_36 = arith.constant 1.000000e+00 : f32
    %288 = vector.broadcast %cst_36 : f32 to vector<8x128xf32>
    %289 = arith.addf %288, %287 : vector<8x128xf32>
    %290 = arith.divf %288, %289 : vector<8x128xf32>
    %291 = math.tanh %285 : vector<8x128xf32>
    %292 = vector.extract_strided_slice %290 {offsets = [0, 32], sizes = [8, 32], strides = [1, 1]} : vector<8x128xf32> to vector<8x32xf32>
    %293 = arith.mulf %292, %259 : vector<8x32xf32>
    %294 = vector.extract_strided_slice %290 {offsets = [0, 0], sizes = [8, 32], strides = [1, 1]} : vector<8x128xf32> to vector<8x32xf32>
    %295 = vector.extract_strided_slice %291 {offsets = [0, 64], sizes = [8, 32], strides = [1, 1]} : vector<8x128xf32> to vector<8x32xf32>
    %296 = arith.mulf %294, %295 : vector<8x32xf32>
    %297 = arith.addf %293, %296 : vector<8x32xf32>
    %298 = vector.extract_strided_slice %290 {offsets = [0, 96], sizes = [8, 32], strides = [1, 1]} : vector<8x128xf32> to vector<8x32xf32>
    %299 = math.tanh %297 : vector<8x32xf32>
    %300 = arith.mulf %298, %299 : vector<8x32xf32>
    %301 = tpu.concatenate %300, %282 in 1 : vector<8x32xf32>, vector<8x32xf32> -> vector<8x64xf32>
    %cst_37 = arith.constant dense<0.000000e+00> : vector<8x256xf32>
    %302 = tpu.matmul %301, %7, %cst_37 {dimension_numbers = #tpu.dot_dimension_numbers<[1], [0], [0], [1], [0, 0, 1, 1], [], []>} : vector<8x64xf32>, vector<64x256xf32>, vector<8x256xf32> -> vector<8x256xf32>
    %303 = vector.extract_strided_slice %302 {offsets = [0, 128], sizes = [8, 128], strides = [1, 1]} : vector<8x256xf32> to vector<8x128xf32>
    %304 = vector.broadcast %8 : vector<1x128xf32> to vector<8x128xf32>
    %305 = arith.addf %303, %304 : vector<8x128xf32>
    %306 = arith.negf %305 : vector<8x128xf32>
    %307 = math.exp %306 : vector<8x128xf32>
    %cst_38 = arith.constant 1.000000e+00 : f32
    %308 = vector.broadcast %cst_38 : f32 to vector<8x128xf32>
    %309 = arith.addf %308, %307 : vector<8x128xf32>
    %310 = arith.divf %308, %309 : vector<8x128xf32>
    %311 = math.tanh %305 : vector<8x128xf32>
    %312 = vector.extract_strided_slice %310 {offsets = [0, 32], sizes = [8, 32], strides = [1, 1]} : vector<8x128xf32> to vector<8x32xf32>
    %313 = arith.mulf %312, %279 : vector<8x32xf32>
    %314 = vector.extract_strided_slice %310 {offsets = [0, 0], sizes = [8, 32], strides = [1, 1]} : vector<8x128xf32> to vector<8x32xf32>
    %315 = vector.extract_strided_slice %311 {offsets = [0, 64], sizes = [8, 32], strides = [1, 1]} : vector<8x128xf32> to vector<8x32xf32>
    %316 = arith.mulf %314, %315 : vector<8x32xf32>
    %317 = arith.addf %313, %316 : vector<8x32xf32>
    %318 = vector.extract_strided_slice %310 {offsets = [0, 96], sizes = [8, 32], strides = [1, 1]} : vector<8x128xf32> to vector<8x32xf32>
    %319 = math.tanh %317 : vector<8x32xf32>
    %320 = arith.mulf %318, %319 : vector<8x32xf32>
    %321 = tpu.concatenate %54, %92, %130, %168, %206, %244, %282, %320 in 0 : vector<8x32xf32>, vector<8x32xf32>, vector<8x32xf32>, vector<8x32xf32>, vector<8x32xf32>, vector<8x32xf32>, vector<8x32xf32>, vector<8x32xf32> -> vector<64x32xf32>
    %cst_39 = arith.constant dense<0.000000e+00> : vector<8x32xf32>
    %322 = tpu.matmul %320, %2, %cst_39 {dimension_numbers = #tpu.dot_dimension_numbers<[1], [0], [0], [1], [0, 0, 1, 1], [], []>} : vector<8x32xf32>, vector<32x32xf32>, vector<8x32xf32> -> vector<8x32xf32>
    %323 = vector.broadcast %4 : vector<1x32xf32> to vector<8x32xf32>
    %324 = arith.addf %322, %323 : vector<8x32xf32>
    %cst_40 = arith.constant dense<0.000000e+00> : vector<64x32xf32>
    %325 = tpu.matmul %321, %1, %cst_40 {dimension_numbers = #tpu.dot_dimension_numbers<[1], [0], [0], [1], [0, 0, 1, 1], [], []>} : vector<64x32xf32>, vector<32x32xf32>, vector<64x32xf32> -> vector<64x32xf32>
    %326 = vector.extract_strided_slice %325 {offsets = [0, 0], sizes = [8, 32], strides = [1, 1]} : vector<64x32xf32> to vector<8x32xf32>
    %327 = vector.extract_strided_slice %324 {offsets = [0, 0], sizes = [1, 32], strides = [1, 1]} : vector<8x32xf32> to vector<1x32xf32>
    %328 = vector.broadcast %327 : vector<1x32xf32> to vector<8x32xf32>
    %329 = arith.addf %326, %328 : vector<8x32xf32>
    %330 = math.tanh %329 : vector<8x32xf32>
    %331 = vector.broadcast %5 : vector<1x32xf32> to vector<8x32xf32>
    %332 = arith.mulf %330, %331 : vector<8x32xf32>
    %cst_41 = arith.constant dense<0.000000e+00> : vector<8xf32>
    %333 = vector.multi_reduction <add>, %332, %cst_41 [1] : vector<8x32xf32> to vector<8xf32>
    %334 = vector.shape_cast %333 : vector<8xf32> to vector<8x1xf32>
    %335 = vector.extract_strided_slice %325 {offsets = [8, 0], sizes = [8, 32], strides = [1, 1]} : vector<64x32xf32> to vector<8x32xf32>
    %336 = vector.extract_strided_slice %324 {offsets = [1, 0], sizes = [1, 32], strides = [1, 1]} : vector<8x32xf32> to vector<1x32xf32>
    %337 = vector.broadcast %336 : vector<1x32xf32> to vector<8x32xf32>
    %338 = arith.addf %335, %337 : vector<8x32xf32>
    %339 = math.tanh %338 : vector<8x32xf32>
    %340 = vector.broadcast %5 : vector<1x32xf32> to vector<8x32xf32>
    %341 = arith.mulf %339, %340 : vector<8x32xf32>
    %cst_42 = arith.constant dense<0.000000e+00> : vector<8xf32>
    %342 = vector.multi_reduction <add>, %341, %cst_42 [1] : vector<8x32xf32> to vector<8xf32>
    %343 = vector.shape_cast %342 : vector<8xf32> to vector<8x1xf32>
    %344 = vector.extract_strided_slice %325 {offsets = [16, 0], sizes = [8, 32], strides = [1, 1]} : vector<64x32xf32> to vector<8x32xf32>
    %345 = vector.extract_strided_slice %324 {offsets = [2, 0], sizes = [1, 32], strides = [1, 1]} : vector<8x32xf32> to vector<1x32xf32>
    %346 = vector.broadcast %345 : vector<1x32xf32> to vector<8x32xf32>
    %347 = arith.addf %344, %346 : vector<8x32xf32>
    %348 = math.tanh %347 : vector<8x32xf32>
    %349 = vector.broadcast %5 : vector<1x32xf32> to vector<8x32xf32>
    %350 = arith.mulf %348, %349 : vector<8x32xf32>
    %cst_43 = arith.constant dense<0.000000e+00> : vector<8xf32>
    %351 = vector.multi_reduction <add>, %350, %cst_43 [1] : vector<8x32xf32> to vector<8xf32>
    %352 = vector.shape_cast %351 : vector<8xf32> to vector<8x1xf32>
    %353 = vector.extract_strided_slice %325 {offsets = [24, 0], sizes = [8, 32], strides = [1, 1]} : vector<64x32xf32> to vector<8x32xf32>
    %354 = vector.extract_strided_slice %324 {offsets = [3, 0], sizes = [1, 32], strides = [1, 1]} : vector<8x32xf32> to vector<1x32xf32>
    %355 = vector.broadcast %354 : vector<1x32xf32> to vector<8x32xf32>
    %356 = arith.addf %353, %355 : vector<8x32xf32>
    %357 = math.tanh %356 : vector<8x32xf32>
    %358 = vector.broadcast %5 : vector<1x32xf32> to vector<8x32xf32>
    %359 = arith.mulf %357, %358 : vector<8x32xf32>
    %cst_44 = arith.constant dense<0.000000e+00> : vector<8xf32>
    %360 = vector.multi_reduction <add>, %359, %cst_44 [1] : vector<8x32xf32> to vector<8xf32>
    %361 = vector.shape_cast %360 : vector<8xf32> to vector<8x1xf32>
    %362 = vector.extract_strided_slice %325 {offsets = [32, 0], sizes = [8, 32], strides = [1, 1]} : vector<64x32xf32> to vector<8x32xf32>
    %363 = vector.extract_strided_slice %324 {offsets = [4, 0], sizes = [1, 32], strides = [1, 1]} : vector<8x32xf32> to vector<1x32xf32>
    %364 = vector.broadcast %363 : vector<1x32xf32> to vector<8x32xf32>
    %365 = arith.addf %362, %364 : vector<8x32xf32>
    %366 = math.tanh %365 : vector<8x32xf32>
    %367 = vector.broadcast %5 : vector<1x32xf32> to vector<8x32xf32>
    %368 = arith.mulf %366, %367 : vector<8x32xf32>
    %cst_45 = arith.constant dense<0.000000e+00> : vector<8xf32>
    %369 = vector.multi_reduction <add>, %368, %cst_45 [1] : vector<8x32xf32> to vector<8xf32>
    %370 = vector.shape_cast %369 : vector<8xf32> to vector<8x1xf32>
    %371 = vector.extract_strided_slice %325 {offsets = [40, 0], sizes = [8, 32], strides = [1, 1]} : vector<64x32xf32> to vector<8x32xf32>
    %372 = vector.extract_strided_slice %324 {offsets = [5, 0], sizes = [1, 32], strides = [1, 1]} : vector<8x32xf32> to vector<1x32xf32>
    %373 = vector.broadcast %372 : vector<1x32xf32> to vector<8x32xf32>
    %374 = arith.addf %371, %373 : vector<8x32xf32>
    %375 = math.tanh %374 : vector<8x32xf32>
    %376 = vector.broadcast %5 : vector<1x32xf32> to vector<8x32xf32>
    %377 = arith.mulf %375, %376 : vector<8x32xf32>
    %cst_46 = arith.constant dense<0.000000e+00> : vector<8xf32>
    %378 = vector.multi_reduction <add>, %377, %cst_46 [1] : vector<8x32xf32> to vector<8xf32>
    %379 = vector.shape_cast %378 : vector<8xf32> to vector<8x1xf32>
    %380 = vector.extract_strided_slice %325 {offsets = [48, 0], sizes = [8, 32], strides = [1, 1]} : vector<64x32xf32> to vector<8x32xf32>
    %381 = vector.extract_strided_slice %324 {offsets = [6, 0], sizes = [1, 32], strides = [1, 1]} : vector<8x32xf32> to vector<1x32xf32>
    %382 = vector.broadcast %381 : vector<1x32xf32> to vector<8x32xf32>
    %383 = arith.addf %380, %382 : vector<8x32xf32>
    %384 = math.tanh %383 : vector<8x32xf32>
    %385 = vector.broadcast %5 : vector<1x32xf32> to vector<8x32xf32>
    %386 = arith.mulf %384, %385 : vector<8x32xf32>
    %cst_47 = arith.constant dense<0.000000e+00> : vector<8xf32>
    %387 = vector.multi_reduction <add>, %386, %cst_47 [1] : vector<8x32xf32> to vector<8xf32>
    %388 = vector.shape_cast %387 : vector<8xf32> to vector<8x1xf32>
    %389 = vector.extract_strided_slice %325 {offsets = [56, 0], sizes = [8, 32], strides = [1, 1]} : vector<64x32xf32> to vector<8x32xf32>
    %390 = vector.extract_strided_slice %324 {offsets = [7, 0], sizes = [1, 32], strides = [1, 1]} : vector<8x32xf32> to vector<1x32xf32>
    %391 = vector.broadcast %390 : vector<1x32xf32> to vector<8x32xf32>
    %392 = arith.addf %389, %391 : vector<8x32xf32>
    %393 = math.tanh %392 : vector<8x32xf32>
    %394 = vector.broadcast %5 : vector<1x32xf32> to vector<8x32xf32>
    %395 = arith.mulf %393, %394 : vector<8x32xf32>
    %cst_48 = arith.constant dense<0.000000e+00> : vector<8xf32>
    %396 = vector.multi_reduction <add>, %395, %cst_48 [1] : vector<8x32xf32> to vector<8xf32>
    %397 = vector.shape_cast %396 : vector<8xf32> to vector<8x1xf32>
    %398 = tpu.concatenate %334, %343, %352, %361, %370, %379, %388, %397 in 1 : vector<8x1xf32>, vector<8x1xf32>, vector<8x1xf32>, vector<8x1xf32>, vector<8x1xf32>, vector<8x1xf32>, vector<8x1xf32>, vector<8x1xf32> -> vector<8x8xf32>
    %cst_49 = arith.constant dense<0xFF800000> : vector<8xf32>
    %399 = vector.multi_reduction <maximumf>, %398, %cst_49 [0] : vector<8x8xf32> to vector<8xf32>
    %400 = vector.shape_cast %399 : vector<8xf32> to vector<1x8xf32>
    %401 = vector.broadcast %400 : vector<1x8xf32> to vector<8x8xf32>
    %402 = arith.subf %398, %401 : vector<8x8xf32>
    %403 = math.exp %402 : vector<8x8xf32>
    %cst_50 = arith.constant dense<0.000000e+00> : vector<8xf32>
    %404 = vector.multi_reduction <add>, %403, %cst_50 [0] : vector<8x8xf32> to vector<8xf32>
    %405 = vector.shape_cast %404 : vector<8xf32> to vector<1x8xf32>
    %406 = vector.broadcast %405 : vector<1x8xf32> to vector<8x8xf32>
    %407 = arith.divf %403, %406 : vector<8x8xf32>
    %408 = tpu.transpose %407, [1, 0] : vector<8x8xf32> -> vector<8x8xf32>
    %cst_51 = arith.constant 0.000000e+00 : f32
    %409 = vector.broadcast %cst_51 : f32 to vector<8x32xf32>
    %410 = vector.extract_strided_slice %408 {offsets = [0, 0], sizes = [8, 1], strides = [1, 1]} : vector<8x8xf32> to vector<8x1xf32>
    %411 = vector.broadcast %410 : vector<8x1xf32> to vector<8x32xf32>
    %412 = arith.mulf %411, %54 : vector<8x32xf32>
    %413 = arith.addf %409, %412 : vector<8x32xf32>
    %414 = vector.extract_strided_slice %408 {offsets = [0, 1], sizes = [8, 1], strides = [1, 1]} : vector<8x8xf32> to vector<8x1xf32>
    %415 = vector.broadcast %414 : vector<8x1xf32> to vector<8x32xf32>
    %416 = arith.mulf %415, %92 : vector<8x32xf32>
    %417 = arith.addf %413, %416 : vector<8x32xf32>
    %418 = vector.extract_strided_slice %408 {offsets = [0, 2], sizes = [8, 1], strides = [1, 1]} : vector<8x8xf32> to vector<8x1xf32>
    %419 = vector.broadcast %418 : vector<8x1xf32> to vector<8x32xf32>
    %420 = arith.mulf %419, %130 : vector<8x32xf32>
    %421 = arith.addf %417, %420 : vector<8x32xf32>
    %422 = vector.extract_strided_slice %408 {offsets = [0, 3], sizes = [8, 1], strides = [1, 1]} : vector<8x8xf32> to vector<8x1xf32>
    %423 = vector.broadcast %422 : vector<8x1xf32> to vector<8x32xf32>
    %424 = arith.mulf %423, %168 : vector<8x32xf32>
    %425 = arith.addf %421, %424 : vector<8x32xf32>
    %426 = vector.extract_strided_slice %408 {offsets = [0, 4], sizes = [8, 1], strides = [1, 1]} : vector<8x8xf32> to vector<8x1xf32>
    %427 = vector.broadcast %426 : vector<8x1xf32> to vector<8x32xf32>
    %428 = arith.mulf %427, %206 : vector<8x32xf32>
    %429 = arith.addf %425, %428 : vector<8x32xf32>
    %430 = vector.extract_strided_slice %408 {offsets = [0, 5], sizes = [8, 1], strides = [1, 1]} : vector<8x8xf32> to vector<8x1xf32>
    %431 = vector.broadcast %430 : vector<8x1xf32> to vector<8x32xf32>
    %432 = arith.mulf %431, %244 : vector<8x32xf32>
    %433 = arith.addf %429, %432 : vector<8x32xf32>
    %434 = vector.extract_strided_slice %408 {offsets = [0, 6], sizes = [8, 1], strides = [1, 1]} : vector<8x8xf32> to vector<8x1xf32>
    %435 = vector.broadcast %434 : vector<8x1xf32> to vector<8x32xf32>
    %436 = arith.mulf %435, %282 : vector<8x32xf32>
    %437 = arith.addf %433, %436 : vector<8x32xf32>
    %438 = vector.extract_strided_slice %408 {offsets = [0, 7], sizes = [8, 1], strides = [1, 1]} : vector<8x8xf32> to vector<8x1xf32>
    %439 = vector.broadcast %438 : vector<8x1xf32> to vector<8x32xf32>
    %440 = arith.mulf %439, %320 : vector<8x32xf32>
    %441 = arith.addf %437, %440 : vector<8x32xf32>
    %cst_52 = arith.constant dense<0.000000e+00> : vector<8x128xf32>
    %442 = tpu.matmul %441, %3, %cst_52 {dimension_numbers = #tpu.dot_dimension_numbers<[1], [0], [0], [1], [0, 0, 1, 1], [], []>} : vector<8x32xf32>, vector<32x128xf32>, vector<8x128xf32> -> vector<8x128xf32>
    %443 = vector.broadcast %6 : vector<1x128xf32> to vector<8x128xf32>
    %444 = arith.addf %442, %443 : vector<8x128xf32>
    %c0_53 = arith.constant 0 : index
    %c0_54 = arith.constant 0 : index
    %445 = vector.load %arg4[%c0_53, %c0_54] : memref<8x128xf32, #tpu.memory_space<vmem>>, vector<8x128xf32>
    tpu.vector_store %arg4[%c0_53, %c0_54], %444 {strides = array<i32>} : memref<8x128xf32, #tpu.memory_space<vmem>>, vector<8x128xf32>,
    return
  }
  func.func @transform_0(%arg0: i32) -> (i32, i32) {
    %c0_i32 = arith.constant 0 : i32
    %c0_i32_0 = arith.constant 0 : i32
    %c0_i32_1 = arith.constant 0 : i32
    return %c0_i32, %c0_i32_0 : i32, i32
  }
  func.func @transform_1(%arg0: i32) -> (i32, i32) {
    %c0_i32 = arith.constant 0 : i32
    %c0_i32_0 = arith.constant 0 : i32
    %c0_i32_1 = arith.constant 0 : i32
    return %c0_i32, %c0_i32_0 : i32, i32
  }
  func.func @transform_2(%arg0: i32) -> (i32, i32) {
    %c0_i32 = arith.constant 0 : i32
    %c0_i32_0 = arith.constant 0 : i32
    %c0_i32_1 = arith.constant 0 : i32
    return %c0_i32, %c0_i32_0 : i32, i32
  }
  func.func @transform_3(%arg0: i32) -> (i32, i32) {
    %c0_i32 = arith.constant 0 : i32
    %c0_i32_0 = arith.constant 0 : i32
    %c0_i32_1 = arith.constant 0 : i32
    return %c0_i32, %c0_i32_0 : i32, i32
  }
}

</mosaic_0001>

<llo_original>
// kernel: text_attn_model_forward.1
$region0: #{text_attn_model_forward.1}
  #allocation0 [shape = 'u32[]', space=smem, size = 0x4, offset = 0x4, fixed_abs, tag = 'smem constant byte address 0x4 - core index']
  #allocation1 [shape = 'u32[144,128]{1,0:T(1,128)}', space=vmem, size = 0x12000, scoped, tag = 'internal scratch']
  %s0 = inlined_call_operand.vmem [shape: s32[64,1], index: 0, kind: input, shape index: {}]
  %s1 = inlined_call_operand.hbm [shape: f32[248,128], index: 1, kind: input, shape index: {}]
  %s2 = inlined_call_operand.hbm [shape: f32[72,256], index: 2, kind: input, shape index: {}]
  %s3 = inlined_call_operand.vmem [shape: f32[8,128], index: 3, kind: output, shape index: {}]
  %s4 = sld [smem:[#allocation0]]
  $region30: #{text_attn_model_forward.1} parent=0
    _
  %s6 = ssub.s32 1, %s4
  %s7 = scalar_select 0, %s6, %s4
  $region1: #{text_attn_model_forward.1} parent=0
    #allocation2 [shape = 'u8[126976]{0}', space=vmem, size = 0x1f000, scoped, tag = 'input window, operand 1, single buffered']
    #allocation3 [shape = 's32[1]{0}', space=sflag, size = 0x4, scoped, tag = 'scoped memory for text_attn_model_forward.1']
    #allocation4 [shape = 'u8[73728]{0}', space=vmem, size = 0x12000, scoped, tag = 'input window, operand 2, single buffered']
    #allocation5 [shape = 's32[1]{0}', space=sflag, size = 0x4, scoped, tag = 'scoped memory for text_attn_model_forward.1']
    %8 = vsyncpa [#allocation3], 0
    %9 = vsyncpa [#allocation5], 0
    // Predicated region
    $region2: #{text_attn_model_forward.1} parent=1 // pred_check
      _
    $region3: #{text_attn_model_forward.1} parent=1 // pred_check_branch
      %11 = sbr.rel (0) target = $region5
    $region4: #{text_attn_model_forward.1} parent=1 // pred_region
      _
    $region5: #{text_attn_model_forward.1} parent=1 // pred_fallthru
      _
    // Predicated region
    $region6: #{text_attn_model_forward.1} parent=1 // pred_check
      _
    $region7: #{text_attn_model_forward.1} parent=1 // pred_check_branch
      %13 = sbr.rel (0) target = $region9
    $region8: #{text_attn_model_forward.1} parent=1 // pred_region
      %s15 = ssub.s32 3968, 3968
      %16 = vsyncadd [#allocation3], %s15
      %s17 = sshll.u32 [#allocation2], 4
      %s18 = int_to_ptr.vmem [resolvable:$true] %s17
      %23 = dma.hbm_to_vmem [thread:$0]  %s1, 3968, %s18, [#allocation3], 128, 128, 8
    $region9: #{text_attn_model_forward.1} parent=1 // pred_fallthru
      _
    // Predicated region
    $region10: #{text_attn_model_forward.1} parent=1 // pred_check
      _
    $region11: #{text_attn_model_forward.1} parent=1 // pred_check_branch
      %25 = sbr.rel (0) target = $region13
    $region12: #{text_attn_model_forward.1} parent=1 // pred_region
      %s27 = ssub.s32 2304, 2304
      %28 = vsyncadd [#allocation5], %s27
      %s29 = sshll.u32 [#allocation4], 4
      %s30 = int_to_ptr.vmem [resolvable:$true] %s29
      %35 = dma.hbm_to_vmem [thread:$0]  %s2, 2304, %s30, [#allocation5], 256, 256, 16
    $region13: #{text_attn_model_forward.1} parent=1 // pred_fallthru
      _
    // Predicated region
    $region14: #{text_attn_model_forward.1} parent=1 // pred_check
      _
    $region15: #{text_attn_model_forward.1} parent=1 // pred_check_branch
      %37 = sbr.rel (0) target = $region17
    $region16: #{text_attn_model_forward.1} parent=1 // pred_region
      %38 = dma.done [#allocation3], 3968
    $region17: #{text_attn_model_forward.1} parent=1 // pred_fallthru
      _
    // Predicated region
    $region18: #{text_attn_model_forward.1} parent=1 // pred_check
      _
    $region19: #{text_attn_model_forward.1} parent=1 // pred_check_branch
      %40 = sbr.rel (0) target = $region21
    $region20: #{text_attn_model_forward.1} parent=1 // pred_region
      %41 = dma.done [#allocation5], 2304
    $region21: #{text_attn_model_forward.1} parent=1 // pred_fallthru
      _
    %v42 = vld [vmem:[#allocation2] sm:$0xff]
    %v43 = vld [vmem:[#allocation2 + $0x8] sm:$0xff]
    %v44 = vld [vmem:[#allocation2 + $0x10] sm:$0xff]
    %v45 = vld [vmem:[#allocation2 + $0x18] sm:$0xff]
    %v46 = vld [vmem:[#allocation2 + $0x20] sm:$0xff]
    %v47 = vld [vmem:[#allocation2 + $0x28] sm:$0xff]
    %v48 = vld [vmem:[#allocation2 + $0x30] sm:$0xff]
    %v49 = vld [vmem:[#allocation2 + $0x38] sm:$0xff]
    %v50 = vld [vmem:[#allocation2 + $0x40] sm:$0xff]
    %v51 = vld [vmem:[#allocation2 + $0x48] sm:$0xff]
    %v52 = vld [vmem:[#allocation2 + $0x50] sm:$0xff]
    %v53 = vld [vmem:[#allocation2 + $0x58] sm:$0xff]
    %v54 = vld [vmem:[#allocation2 + $0x60] sm:$0xff]
    %v55 = vld [vmem:[#allocation2 + $0x68] sm:$0xff]
    %v56 = vld [vmem:[#allocation2 + $0x70] sm:$0xff]
    %v57 = vld [vmem:[#allocation2 + $0x78] sm:$0xff]
    %v58 = vld [vmem:[#allocation2 + $0x80] sm:$0xff]
    %v59 = vld [vmem:[#allocation2 + $0x88] sm:$0xff]
    %v60 = vld [vmem:[#allocation2 + $0x90] sm:$0xff]
    %v61 = vld [vmem:[#allocation2 + $0x98] sm:$0xff]
    %v62 = vld [vmem:[#allocation2 + $0xa0] sm:$0xff]
    %v63 = vld [vmem:[#allocation2 + $0xa8] sm:$0xff]
    %v64 = vld [vmem:[#allocation2 + $0xb0] sm:$0xff]
    %v65 = vld [vmem:[#allocation2 + $0xb8] sm:$0xff]
    %v66 = vld [vmem:[#allocation2 + $0xc0] sm:$0xff]
    %v67 = vld [vmem:[#allocation2 + $0xc8] sm:$0xff]
    %v68 = vld [vmem:[#allocation2 + $0xd0] sm:$0xff]
    %v69 = vld [vmem:[#allocation2 + $0xd8] sm:$0xff]
    %v70 = vld [vmem:[#allocation2 + $0xe0] sm:$0x1]
    %v71 = vld [vmem:[#allocation2 + $0xe8] sm:$0x1]
    %v72 = vld [vmem:[#allocation2 + $0xf0] sm:$0x1]
    %v73 = vld [vmem:[#allocation4] sm:$0xff]
    %v74 = vld [vmem:[#allocation4 + $0x8] sm:$0xff]
    %v75 = vld [vmem:[#allocation4 + $0x10] sm:$0xff]
    %v76 = vld [vmem:[#allocation4 + $0x18] sm:$0xff]
    %v77 = vld [vmem:[#allocation4 + $0x20] sm:$0xff]
    %v78 = vld [vmem:[#allocation4 + $0x28] sm:$0xff]
    %v79 = vld [vmem:[#allocation4 + $0x30] sm:$0xff]
    %v80 = vld [vmem:[#allocation4 + $0x38] sm:$0xff]
    %v81 = vld [vmem:[#allocation4 + $0x40] sm:$0xff]
    %v82 = vld [vmem:[#allocation4 + $0x48] sm:$0xff]
    %v83 = vld [vmem:[#allocation4 + $0x50] sm:$0xff]
    %v84 = vld [vmem:[#allocation4 + $0x58] sm:$0xff]
    %v85 = vld [vmem:[#allocation4 + $0x60] sm:$0xff]
    %v86 = vld [vmem:[#allocation4 + $0x68] sm:$0xff]
    %v87 = vld [vmem:[#allocation4 + $0x70] sm:$0xff]
    %v88 = vld [vmem:[#allocation4 + $0x78] sm:$0xff]
    %v89 = vld [vmem:[#allocation4 + $0x88] ss:$0 sm:$0xff]
    %v90 = vld [vmem:[%s0] sm:$0xff]
    %v91 = vld [vmem:[%s0 + $0x8] sm:$0xff]
    %v92 = vld [vmem:[%s0 + $0x10] sm:$0xff]
    %v93 = vld [vmem:[%s0 + $0x18] sm:$0xff]
    %v94 = vld [vmem:[%s0 + $0x20] sm:$0xff]
    %v95 = vld [vmem:[%s0 + $0x28] sm:$0xff]
    %v96 = vld [vmem:[%s0 + $0x30] sm:$0xff]
    %v97 = vld [vmem:[%s0 + $0x38] sm:$0xff]
    %v98 = vlaneseq
    %v99 = vand.u32 %v98, 127
    %100 = vset.pattern.permute.xlu0 0
    %101 = vperm.xlu0 %100, %v90
    %v102 = vpop.permute.xlu0 %101
    %103 = vset.pattern.permute.xlu0 0
    %104 = vperm.xlu0 %103, %v91
    %v105 = vpop.permute.xlu0 %104
    %106 = vset.pattern.permute.xlu0 0
    %107 = vperm.xlu0 %106, %v92
    %v108 = vpop.permute.xlu0 %107
    %109 = vset.pattern.permute.xlu0 0
    %110 = vperm.xlu0 %109, %v93
    %v111 = vpop.permute.xlu0 %110
    %112 = vset.pattern.permute.xlu0 0
    %113 = vperm.xlu0 %112, %v94
    %v114 = vpop.permute.xlu0 %113
    %115 = vset.pattern.permute.xlu0 0
    %116 = vperm.xlu0 %115, %v95
    %v117 = vpop.permute.xlu0 %116
    %118 = vset.pattern.permute.xlu0 0
    %119 = vperm.xlu0 %118, %v96
    %v120 = vpop.permute.xlu0 %119
    %121 = vset.pattern.permute.xlu0 0
    %122 = vperm.xlu0 %121, %v97
    %v123 = vpop.permute.xlu0 %122
    %vm124 = vcmp.eq.s32.totalorder %v99, %v102
    %vm125 = vcmp.eq.s32.totalorder %v99, %v105
    %vm126 = vcmp.eq.s32.totalorder %v99, %v108
    %vm127 = vcmp.eq.s32.totalorder %v99, %v111
    %vm128 = vcmp.eq.s32.totalorder %v99, %v114
    %vm129 = vcmp.eq.s32.totalorder %v99, %v117
    %vm130 = vcmp.eq.s32.totalorder %v99, %v120
    %vm131 = vcmp.eq.s32.totalorder %v99, %v123
    %v132 = vsel %vm124, 1, 0
    %v133 = vsel %vm125, 1, 0
    %v134 = vsel %vm126, 1, 0
    %v135 = vsel %vm127, 1, 0
    %v136 = vsel %vm128, 1, 0
    %v137 = vsel %vm129, 1, 0
    %v138 = vsel %vm130, 1, 0
    %v139 = vsel %vm131, 1, 0
    %v140 = vcvt.s32.f32 %v132
    %v141 = vcvt.s32.f32 %v133
    %v142 = vcvt.s32.f32 %v134
    %v143 = vcvt.s32.f32 %v135
    %v144 = vcvt.s32.f32 %v136
    %v145 = vcvt.s32.f32 %v137
    %v146 = vcvt.s32.f32 %v138
    %v147 = vcvt.s32.f32 %v139
    %148 = vmatprep.subr.mxu0 0.0
    %149 = vmatpush1.msra.mxu0 %v57
    %150 = vmatprep.subr.mxu0 0.0
    %151 = vmatpush1.msra.mxu0 %v56
    %152 = vmatprep.subr.mxu0 0.0
    %153 = vmatpush1.msra.mxu0 %v55
    %154 = vmatprep.subr.mxu0 0.0
    %155 = vmatpush1.msra.mxu0 %v54
    %156 = vmatprep.subr.mxu0 0.0
    %157 = vmatpush1.msra.mxu0 %v53
    %158 = vmatprep.subr.mxu0 0.0
    %159 = vmatpush1.msra.mxu0 %v52
    %160 = vmatprep.subr.mxu0 0.0
    %161 = vmatpush1.msra.mxu0 %v51
    %162 = vmatprep.subr.mxu0 0.0
    %163 = vmatpush1.msra.mxu0 %v50
    %164 = vmatprep.subr.mxu0 0.0
    %165 = vmatpush1.msra.mxu0 %v49
    %166 = vmatprep.subr.mxu0 0.0
    %167 = vmatpush1.msra.mxu0 %v48
    %168 = vmatprep.subr.mxu0 0.0
    %169 = vmatpush1.msra.mxu0 %v47
    %170 = vmatprep.subr.mxu0 0.0
    %171 = vmatpush1.msra.mxu0 %v46
    %172 = vmatprep.subr.mxu0 0.0
    %173 = vmatpush1.msra.mxu0 %v45
    %174 = vmatprep.subr.mxu0 0.0
    %175 = vmatpush1.msra.mxu0 %v44
    %176 = vmatprep.subr.mxu0 0.0
    %177 = vmatpush1.msra.mxu0 %v43
    %178 = vmatprep.subr.mxu0 0.0
    %179 = vmatpush1.msra.mxu0 %v42
    %180 = vmatprep.subr.mxu0 0.0
    %181 = vmatpush2.msra.mxu0 0.0
    %182 = vmatprep.subr.mxu0 0.0
    %183 = vmatpush2.msra.mxu0 0.0
    %184 = vmatprep.subr.mxu0 0.0
    %185 = vmatpush2.msra.mxu0 0.0
    %186 = vmatprep.subr.mxu0 0.0
    %187 = vmatpush2.msra.mxu0 0.0
    %188 = vmatprep.subr.mxu0 0.0
    %189 = vmatpush2.msra.mxu0 0.0
    %190 = vmatprep.subr.mxu0 0.0
    %191 = vmatpush2.msra.mxu0 0.0
    %192 = vmatprep.subr.mxu0 0.0
    %193 = vmatpush2.msra.mxu0 0.0
    %194 = vmatprep.subr.mxu0 0.0
    %195 = vmatpush2.msra.mxu0 0.0
    %196 = vmatprep.subr.mxu0 0.0
    %197 = vmatpush2.msra.mxu0 0.0
    %198 = vmatprep.subr.mxu0 0.0
    %199 = vmatpush2.msra.mxu0 0.0
    %200 = vmatprep.subr.mxu0 0.0
    %201 = vmatpush2.msra.mxu0 0.0
    %202 = vmatprep.subr.mxu0 0.0
    %203 = vmatpush2.msra.mxu0 0.0
    %204 = vmatprep.subr.mxu0 0.0
    %205 = vmatpush2.msra.mxu0 0.0
    %206 = vmatprep.subr.mxu0 0.0
    %207 = vmatpush2.msra.mxu0 0.0
    %208 = vmatprep.subr.mxu0 0.0
    %209 = vmatpush2.msra.mxu0 0.0
    %210 = vmatprep.subr.mxu0 0.0
    %211 = vmatpush2.msra.mxu0 0.0
    %212 = vmatprep.mubr.f32.mxu0 0.0
    %213 = vmatmul.mubr.f32.gmra.mxu0 %v140
    %v214 = vpop.f32.mrf.mxu0
    %v215 = vadd.f32 0.0, %v214
    %v216 = vpop.f32.mrf.mxu0
    %217 = vmatprep.mubr.f32.mxu0 0.0
    %218 = vmatmul.mubr.f32.gmra.mxu0 %v141
    %v219 = vpop.f32.mrf.mxu0
    %v220 = vadd.f32 0.0, %v219
    %v221 = vpop.f32.mrf.mxu0
    %222 = vmatprep.mubr.f32.mxu0 0.0
    %223 = vmatmul.mubr.f32.gmra.mxu0 %v142
    %v224 = vpop.f32.mrf.mxu0
    %v225 = vadd.f32 0.0, %v224
    %v226 = vpop.f32.mrf.mxu0
    %227 = vmatprep.mubr.f32.mxu0 0.0
    %228 = vmatmul.mubr.f32.gmra.mxu0 %v143
    %v229 = vpop.f32.mrf.mxu0
    %v230 = vadd.f32 0.0, %v229
    %v231 = vpop.f32.mrf.mxu0
    %232 = vmatprep.mubr.f32.mxu0 0.0
    %233 = vmatmul.mubr.f32.gmra.mxu0 %v144
    %v234 = vpop.f32.mrf.mxu0
    %v235 = vadd.f32 0.0, %v234
    %v236 = vpop.f32.mrf.mxu0
    %237 = vmatprep.mubr.f32.mxu0 0.0
    %238 = vmatmul.mubr.f32.gmra.mxu0 %v145
    %v239 = vpop.f32.mrf.mxu0
    %v240 = vadd.f32 0.0, %v239
    %v241 = vpop.f32.mrf.mxu0
    %242 = vmatprep.mubr.f32.mxu0 0.0
    %243 = vmatmul.mubr.f32.gmra.mxu0 %v146
    %v244 = vpop.f32.mrf.mxu0
    %v245 = vadd.f32 0.0, %v244
    %v246 = vpop.f32.mrf.mxu0
    %247 = vmatprep.mubr.f32.mxu0 0.0
    %248 = vmatmul.mubr.f32.gmra.mxu0 %v147
    %v249 = vpop.f32.mrf.mxu0
    %v250 = vadd.f32 0.0, %v249
    %v251 = vpop.f32.mrf.mxu0
    %252 = vdwg.mxu0
    %v253 = vxor.u32 %v215, 2147483648
    %v254 = vmul.f32 %v253, 1.442695
    %v255 = vpow.pop %v254
    %v256 = vadd.f32 %v255, 1.0
    %v257 = vrcp.pop %v256
    %v258 = vmul.f32 1.0, %v257
    %v259 = vtanh.pop %v215
    %v260 = vmul.f32 %v258, 0.0
    %262 = vrot.lane.b32.xlu0 %v259, 64
    %v263 = vpop.permute.xlu0 %262
    %v265 = vmul.f32 %v258, %v263
    %267 = vrot.lane.b32.xlu0 %v265, 32
    %v268 = vpop.permute.xlu0 %267
    %v270 = vadd.f32 %v260, %v268
    %v271 = vtanh.pop %v270
    %273 = vrot.lane.b32.xlu0 %v271, 64
    %v274 = vpop.permute.xlu0 %273
    %v276 = vmul.f32 %v258, %v274
    %278 = vrot.lane.b32.xlu0 %v276, 32
    %v279 = vpop.permute.xlu0 %278
    %vm281 = vcmask 261120
    %v282 = vsel %vm281, %v279, 0.0
    %vm283 = vcmask 523264
    %v285 = vsel %vm283, %v282, 0
    %287 = vmatprep.subr.mxu0 0.0
    %288 = vmatpush1.msra.mxu0 0.0
    %289 = vmatprep.subr.mxu0 0.0
    %290 = vmatpush1.msra.mxu0 0.0
    %291 = vmatprep.subr.mxu0 0.0
    %292 = vmatpush1.msra.mxu0 0.0
    %293 = vmatprep.subr.mxu0 0.0
    %294 = vmatpush1.msra.mxu0 0.0
    %295 = vmatprep.subr.mxu0 0.0
    %296 = vmatpush1.msra.mxu0 0.0
    %297 = vmatprep.subr.mxu0 0.0
    %298 = vmatpush1.msra.mxu0 0.0
    %299 = vmatprep.subr.mxu0 0.0
    %300 = vmatpush1.msra.mxu0 0.0
    %301 = vmatprep.subr.mxu0 0.0
    %302 = vmatpush1.msra.mxu0 0.0
    %303 = vmatprep.subr.mxu0 %v88
    %304 = vmatpush1.msra.mxu0 %v87
    %305 = vmatprep.subr.mxu0 %v86
    %306 = vmatpush1.msra.mxu0 %v85
    %307 = vmatprep.subr.mxu0 %v84
    %308 = vmatpush1.msra.mxu0 %v83
    %309 = vmatprep.subr.mxu0 %v82
    %310 = vmatpush1.msra.mxu0 %v81
    %311 = vmatprep.subr.mxu0 %v80
    %312 = vmatpush1.msra.mxu0 %v79
    %313 = vmatprep.subr.mxu0 %v78
    %314 = vmatpush1.msra.mxu0 %v77
    %315 = vmatprep.subr.mxu0 %v76
    %316 = vmatpush1.msra.mxu0 %v75
    %317 = vmatprep.subr.mxu0 %v74
    %318 = vmatpush1.msra.mxu0 %v73
    %319 = vmatprep.subr.mxu0 0.0
    %320 = vmatpush2.msra.mxu0 0.0
    %321 = vmatprep.subr.mxu0 0.0
    %322 = vmatpush2.msra.mxu0 0.0
    %323 = vmatprep.subr.mxu0 0.0
    %324 = vmatpush2.msra.mxu0 0.0
    %325 = vmatprep.subr.mxu0 0.0
    %326 = vmatpush2.msra.mxu0 0.0
    %327 = vmatprep.subr.mxu0 0.0
    %328 = vmatpush2.msra.mxu0 0.0
    %329 = vmatprep.subr.mxu0 0.0
    %330 = vmatpush2.msra.mxu0 0.0
    %331 = vmatprep.subr.mxu0 0.0
    %332 = vmatpush2.msra.mxu0 0.0
    %333 = vmatprep.subr.mxu0 0.0
    %334 = vmatpush2.msra.mxu0 0.0
    %335 = vmatprep.subr.mxu0 0.0
    %336 = vmatpush2.msra.mxu0 0.0
    %337 = vmatprep.subr.mxu0 0.0
    %338 = vmatpush2.msra.mxu0 0.0
    %339 = vmatprep.subr.mxu0 0.0
    %340 = vmatpush2.msra.mxu0 0.0
    %341 = vmatprep.subr.mxu0 0.0
    %342 = vmatpush2.msra.mxu0 0.0
    %343 = vmatprep.subr.mxu0 0.0
    %344 = vmatpush2.msra.mxu0 0.0
    %345 = vmatprep.subr.mxu0 0.0
    %346 = vmatpush2.msra.mxu0 0.0
    %347 = vmatprep.subr.mxu0 0.0
    %348 = vmatpush2.msra.mxu0 0.0
    %349 = vmatprep.subr.mxu0 0.0
    %350 = vmatpush2.msra.mxu0 0.0
    %351 = vmatprep.mubr.f32.mxu0 0.0
    %352 = vmatmul.mubr.f32.gmra.mxu0 %v285
    %v353 = vpop.f32.mrf.mxu0
    %v354 = vadd.f32 0.0, %v353
    %v355 = vpop.f32.mrf.mxu0
    %v356 = vadd.f32 0.0, %v355
    %357 = vdwg.mxu0
    %v358 = vadd.f32 %v356, %v89
    %v359 = vxor.u32 %v358, 2147483648
    %v360 = vmul.f32 %v359, 1.442695
    %v361 = vpow.pop %v360
    %v362 = vadd.f32 %v361, 1.0
    %v363 = vrcp.pop %v362
    %v364 = vmul.f32 1.0, %v363
    %v365 = vtanh.pop %v358
    %v366 = vmul.f32 %v364, 0.0
    %368 = vrot.lane.b32.xlu0 %v365, 64
    %v369 = vpop.permute.xlu0 %368
    %v371 = vmul.f32 %v364, %v369
    %373 = vrot.lane.b32.xlu0 %v371, 32
    %v374 = vpop.permute.xlu0 %373
    %v376 = vadd.f32 %v366, %v374
    %v377 = vtanh.pop %v376
    %379 = vrot.lane.b32.xlu0 %v377, 64
    %v380 = vpop.permute.xlu0 %379
    %v382 = vmul.f32 %v364, %v380
    %v383 = vadd.f32 %v220, %v354
    %v384 = vxor.u32 %v383, 2147483648
    %v385 = vmul.f32 %v384, 1.442695
    %v386 = vpow.pop %v385
    %v387 = vadd.f32 %v386, 1.0
    %v388 = vrcp.pop %v387
    %v389 = vmul.f32 1.0, %v388
    %v390 = vtanh.pop %v383
    %v391 = vmul.f32 %v389, %v270
    %393 = vrot.lane.b32.xlu0 %v390, 64
    %v394 = vpop.permute.xlu0 %393
    %v396 = vmul.f32 %v389, %v394
    %398 = vrot.lane.b32.xlu0 %v396, 32
    %v399 = vpop.permute.xlu0 %398
    %v401 = vadd.f32 %v391, %v399
    %v402 = vtanh.pop %v401
    %404 = vrot.lane.b32.xlu0 %v402, 64
    %v405 = vpop.permute.xlu0 %404
    %v407 = vmul.f32 %v389, %v405
    %409 = vrot.lane.b32.xlu0 %v407, 32
    %v410 = vpop.permute.xlu0 %409
    %413 = vrot.lane.b32.xlu0 %v382, 64
    %v414 = vpop.permute.xlu0 %413
    %v416 = vsel %vm281, %v410, %v414
    %v418 = vsel %vm283, %v416, 0
    %420 = vmatprep.subr.mxu0 0.0
    %421 = vmatpush1.msra.mxu0 0.0
    %422 = vmatprep.subr.mxu0 0.0
    %423 = vmatpush1.msra.mxu0 0.0
    %424 = vmatprep.subr.mxu0 0.0
    %425 = vmatpush1.msra.mxu0 0.0
    %426 = vmatprep.subr.mxu0 0.0
    %427 = vmatpush1.msra.mxu0 0.0
    %428 = vmatprep.subr.mxu0 0.0
    %429 = vmatpush1.msra.mxu0 0.0
    %430 = vmatprep.subr.mxu0 0.0
    %431 = vmatpush1.msra.mxu0 0.0
    %432 = vmatprep.subr.mxu0 0.0
    %433 = vmatpush1.msra.mxu0 0.0
    %434 = vmatprep.subr.mxu0 0.0
    %435 = vmatpush1.msra.mxu0 0.0
    %436 = vmatprep.subr.mxu0 %v88
    %437 = vmatpush1.msra.mxu0 %v87
    %438 = vmatprep.subr.mxu0 %v86
    %439 = vmatpush1.msra.mxu0 %v85
    %440 = vmatprep.subr.mxu0 %v84
    %441 = vmatpush1.msra.mxu0 %v83
    %442 = vmatprep.subr.mxu0 %v82
    %443 = vmatpush1.msra.mxu0 %v81
    %444 = vmatprep.subr.mxu0 %v80
    %445 = vmatpush1.msra.mxu0 %v79
    %446 = vmatprep.subr.mxu0 %v78
    %447 = vmatpush1.msra.mxu0 %v77
    %448 = vmatprep.subr.mxu0 %v76
    %449 = vmatpush1.msra.mxu0 %v75
    %450 = vmatprep.subr.mxu0 %v74
    %451 = vmatpush1.msra.mxu0 %v73
    %452 = vmatprep.subr.mxu0 0.0
    %453 = vmatpush2.msra.mxu0 0.0
    %454 = vmatprep.subr.mxu0 0.0
    %455 = vmatpush2.msra.mxu0 0.0
    %456 = vmatprep.subr.mxu0 0.0
    %457 = vmatpush2.msra.mxu0 0.0
    %458 = vmatprep.subr.mxu0 0.0
    %459 = vmatpush2.msra.mxu0 0.0
    %460 = vmatprep.subr.mxu0 0.0
    %461 = vmatpush2.msra.mxu0 0.0
    %462 = vmatprep.subr.mxu0 0.0
    %463 = vmatpush2.msra.mxu0 0.0
    %464 = vmatprep.subr.mxu0 0.0
    %465 = vmatpush2.msra.mxu0 0.0
    %466 = vmatprep.subr.mxu0 0.0
    %467 = vmatpush2.msra.mxu0 0.0
    %468 = vmatprep.subr.mxu0 0.0
    %469 = vmatpush2.msra.mxu0 0.0
    %470 = vmatprep.subr.mxu0 0.0
    %471 = vmatpush2.msra.mxu0 0.0
    %472 = vmatprep.subr.mxu0 0.0
    %473 = vmatpush2.msra.mxu0 0.0
    %474 = vmatprep.subr.mxu0 0.0
    %475 = vmatpush2.msra.mxu0 0.0
    %476 = vmatprep.subr.mxu0 0.0
    %477 = vmatpush2.msra.mxu0 0.0
    %478 = vmatprep.subr.mxu0 0.0
    %479 = vmatpush2.msra.mxu0 0.0
    %480 = vmatprep.subr.mxu0 0.0
    %481 = vmatpush2.msra.mxu0 0.0
    %482 = vmatprep.subr.mxu0 0.0
    %483 = vmatpush2.msra.mxu0 0.0
    %484 = vmatprep.mubr.f32.mxu0 0.0
    %485 = vmatmul.mubr.f32.gmra.mxu0 %v418
    %v486 = vpop.f32.mrf.mxu0
    %v487 = vadd.f32 0.0, %v486
    %v488 = vpop.f32.mrf.mxu0
    %v489 = vadd.f32 0.0, %v488
    %490 = vdwg.mxu0
    %v491 = vadd.f32 %v489, %v89
    %v492 = vxor.u32 %v491, 2147483648
    %v493 = vmul.f32 %v492, 1.442695
    %v494 = vpow.pop %v493
    %v495 = vadd.f32 %v494, 1.0
    %v496 = vrcp.pop %v495
    %v497 = vmul.f32 1.0, %v496
    %v498 = vtanh.pop %v491
    %v499 = vmul.f32 %v497, %v376
    %501 = vrot.lane.b32.xlu0 %v498, 64
    %v502 = vpop.permute.xlu0 %501
    %v504 = vmul.f32 %v497, %v502
    %506 = vrot.lane.b32.xlu0 %v504, 32
    %v507 = vpop.permute.xlu0 %506
    %v509 = vadd.f32 %v499, %v507
    %v510 = vtanh.pop %v509
    %512 = vrot.lane.b32.xlu0 %v510, 64
    %v513 = vpop.permute.xlu0 %512
    %v515 = vmul.f32 %v497, %v513
    %v516 = vadd.f32 %v225, %v487
    %v517 = vxor.u32 %v516, 2147483648
    %v518 = vmul.f32 %v517, 1.442695
    %v519 = vpow.pop %v518
    %v520 = vadd.f32 %v519, 1.0
    %v521 = vrcp.pop %v520
    %v522 = vmul.f32 1.0, %v521
    %v523 = vtanh.pop %v516
    %v524 = vmul.f32 %v522, %v401
    %526 = vrot.lane.b32.xlu0 %v523, 64
    %v527 = vpop.permute.xlu0 %526
    %v529 = vmul.f32 %v522, %v527
    %531 = vrot.lane.b32.xlu0 %v529, 32
    %v532 = vpop.permute.xlu0 %531
    %v534 = vadd.f32 %v524, %v532
    %v535 = vtanh.pop %v534
    %537 = vrot.lane.b32.xlu0 %v535, 64
    %v538 = vpop.permute.xlu0 %537
    %v540 = vmul.f32 %v522, %v538
    %542 = vrot.lane.b32.xlu0 %v540, 32
    %v543 = vpop.permute.xlu0 %542
    %546 = vrot.lane.b32.xlu0 %v515, 64
    %v547 = vpop.permute.xlu0 %546
    %v549 = vsel %vm281, %v543, %v547
    %v551 = vsel %vm283, %v549, 0
    %553 = vmatprep.subr.mxu0 0.0
    %554 = vmatpush1.msra.mxu0 0.0
    %555 = vmatprep.subr.mxu0 0.0
    %556 = vmatpush1.msra.mxu0 0.0
    %557 = vmatprep.subr.mxu0 0.0
    %558 = vmatpush1.msra.mxu0 0.0
    %559 = vmatprep.subr.mxu0 0.0
    %560 = vmatpush1.msra.mxu0 0.0
    %561 = vmatprep.subr.mxu0 0.0
    %562 = vmatpush1.msra.mxu0 0.0
    %563 = vmatprep.subr.mxu0 0.0
    %564 = vmatpush1.msra.mxu0 0.0
    %565 = vmatprep.subr.mxu0 0.0
    %566 = vmatpush1.msra.mxu0 0.0
    %567 = vmatprep.subr.mxu0 0.0
    %568 = vmatpush1.msra.mxu0 0.0
    %569 = vmatprep.subr.mxu0 %v88
    %570 = vmatpush1.msra.mxu0 %v87
    %571 = vmatprep.subr.mxu0 %v86
    %572 = vmatpush1.msra.mxu0 %v85
    %573 = vmatprep.subr.mxu0 %v84
    %574 = vmatpush1.msra.mxu0 %v83
    %575 = vmatprep.subr.mxu0 %v82
    %576 = vmatpush1.msra.mxu0 %v81
    %577 = vmatprep.subr.mxu0 %v80
    %578 = vmatpush1.msra.mxu0 %v79
    %579 = vmatprep.subr.mxu0 %v78
    %580 = vmatpush1.msra.mxu0 %v77
    %581 = vmatprep.subr.mxu0 %v76
    %582 = vmatpush1.msra.mxu0 %v75
    %583 = vmatprep.subr.mxu0 %v74
    %584 = vmatpush1.msra.mxu0 %v73
    %585 = vmatprep.subr.mxu0 0.0
    %586 = vmatpush2.msra.mxu0 0.0
    %587 = vmatprep.subr.mxu0 0.0
    %588 = vmatpush2.msra.mxu0 0.0
    %589 = vmatprep.subr.mxu0 0.0
    %590 = vmatpush2.msra.mxu0 0.0
    %591 = vmatprep.subr.mxu0 0.0
    %592 = vmatpush2.msra.mxu0 0.0
    %593 = vmatprep.subr.mxu0 0.0
    %594 = vmatpush2.msra.mxu0 0.0
    %595 = vmatprep.subr.mxu0 0.0
    %596 = vmatpush2.msra.mxu0 0.0
    %597 = vmatprep.subr.mxu0 0.0
    %598 = vmatpush2.msra.mxu0 0.0
    %599 = vmatprep.subr.mxu0 0.0
    %600 = vmatpush2.msra.mxu0 0.0
    %601 = vmatprep.subr.mxu0 0.0
    %602 = vmatpush2.msra.mxu0 0.0
    %603 = vmatprep.subr.mxu0 0.0
    %604 = vmatpush2.msra.mxu0 0.0
    %605 = vmatprep.subr.mxu0 0.0
    %606 = vmatpush2.msra.mxu0 0.0
    %607 = vmatprep.subr.mxu0 0.0
    %608 = vmatpush2.msra.mxu0 0.0
    %609 = vmatprep.subr.mxu0 0.0
    %610 = vmatpush2.msra.mxu0 0.0
    %611 = vmatprep.subr.mxu0 0.0
    %612 = vmatpush2.msra.mxu0 0.0
    %613 = vmatprep.subr.mxu0 0.0
    %614 = vmatpush2.msra.mxu0 0.0
    %615 = vmatprep.subr.mxu0 0.0
    %616 = vmatpush2.msra.mxu0 0.0
    %617 = vmatprep.mubr.f32.mxu0 0.0
    %618 = vmatmul.mubr.f32.gmra.mxu0 %v551
    %v619 = vpop.f32.mrf.mxu0
    %v620 = vadd.f32 0.0, %v619
    %v621 = vpop.f32.mrf.mxu0
    %v622 = vadd.f32 0.0, %v621
    %623 = vdwg.mxu0
    %v624 = vadd.f32 %v622, %v89
    %v625 = vxor.u32 %v624, 2147483648
    %v626 = vmul.f32 %v625, 1.442695
    %v627 = vpow.pop %v626
    %v628 = vadd.f32 %v627, 1.0
    %v629 = vrcp.pop %v628
    %v630 = vmul.f32 1.0, %v629
    %v631 = vtanh.pop %v624
    %v632 = vmul.f32 %v630, %v509
    %634 = vrot.lane.b32.xlu0 %v631, 64
    %v635 = vpop.permute.xlu0 %634
    %v637 = vmul.f32 %v630, %v635
    %639 = vrot.lane.b32.xlu0 %v637, 32
    %v640 = vpop.permute.xlu0 %639
    %v642 = vadd.f32 %v632, %v640
    %v643 = vtanh.pop %v642
    %645 = vrot.lane.b32.xlu0 %v643, 64
    %v646 = vpop.permute.xlu0 %645
    %v648 = vmul.f32 %v630, %v646
    %v649 = vadd.f32 %v230, %v620
    %v650 = vxor.u32 %v649, 2147483648
    %v651 = vmul.f32 %v650, 1.442695
    %v652 = vpow.pop %v651
    %v653 = vadd.f32 %v652, 1.0
    %v654 = vrcp.pop %v653
    %v655 = vmul.f32 1.0, %v654
    %v656 = vtanh.pop %v649
    %v657 = vmul.f32 %v655, %v534
    %659 = vrot.lane.b32.xlu0 %v656, 64
    %v660 = vpop.permute.xlu0 %659
    %v662 = vmul.f32 %v655, %v660
    %664 = vrot.lane.b32.xlu0 %v662, 32
    %v665 = vpop.permute.xlu0 %664
    %v667 = vadd.f32 %v657, %v665
    %v668 = vtanh.pop %v667
    %670 = vrot.lane.b32.xlu0 %v668, 64
    %v671 = vpop.permute.xlu0 %670
    %v673 = vmul.f32 %v655, %v671
    %675 = vrot.lane.b32.xlu0 %v673, 32
    %v676 = vpop.permute.xlu0 %675
    %679 = vrot.lane.b32.xlu0 %v648, 64
    %v680 = vpop.permute.xlu0 %679
    %v682 = vsel %vm281, %v676, %v680
    %v684 = vsel %vm283, %v682, 0
    %686 = vmatprep.subr.mxu0 0.0
    %687 = vmatpush1.msra.mxu0 0.0
    %688 = vmatprep.subr.mxu0 0.0
    %689 = vmatpush1.msra.mxu0 0.0
    %690 = vmatprep.subr.mxu0 0.0
    %691 = vmatpush1.msra.mxu0 0.0
    %692 = vmatprep.subr.mxu0 0.0
    %693 = vmatpush1.msra.mxu0 0.0
    %694 = vmatprep.subr.mxu0 0.0
    %695 = vmatpush1.msra.mxu0 0.0
    %696 = vmatprep.subr.mxu0 0.0
    %697 = vmatpush1.msra.mxu0 0.0
    %698 = vmatprep.subr.mxu0 0.0
    %699 = vmatpush1.msra.mxu0 0.0
    %700 = vmatprep.subr.mxu0 0.0
    %701 = vmatpush1.msra.mxu0 0.0
    %702 = vmatprep.subr.mxu0 %v88
    %703 = vmatpush1.msra.mxu0 %v87
    %704 = vmatprep.subr.mxu0 %v86
    %705 = vmatpush1.msra.mxu0 %v85
    %706 = vmatprep.subr.mxu0 %v84
    %707 = vmatpush1.msra.mxu0 %v83
    %708 = vmatprep.subr.mxu0 %v82
    %709 = vmatpush1.msra.mxu0 %v81
    %710 = vmatprep.subr.mxu0 %v80
    %711 = vmatpush1.msra.mxu0 %v79
    %712 = vmatprep.subr.mxu0 %v78
    %713 = vmatpush1.msra.mxu0 %v77
    %714 = vmatprep.subr.mxu0 %v76
    %715 = vmatpush1.msra.mxu0 %v75
    %716 = vmatprep.subr.mxu0 %v74
    %717 = vmatpush1.msra.mxu0 %v73
    %718 = vmatprep.subr.mxu0 0.0
    %719 = vmatpush2.msra.mxu0 0.0
    %720 = vmatprep.subr.mxu0 0.0
    %721 = vmatpush2.msra.mxu0 0.0
    %722 = vmatprep.subr.mxu0 0.0
    %723 = vmatpush2.msra.mxu0 0.0
    %724 = vmatprep.subr.mxu0 0.0
    %725 = vmatpush2.msra.mxu0 0.0
    %726 = vmatprep.subr.mxu0 0.0
    %727 = vmatpush2.msra.mxu0 0.0
    %728 = vmatprep.subr.mxu0 0.0
    %729 = vmatpush2.msra.mxu0 0.0
    %730 = vmatprep.subr.mxu0 0.0
    %731 = vmatpush2.msra.mxu0 0.0
    %732 = vmatprep.subr.mxu0 0.0
    %733 = vmatpush2.msra.mxu0 0.0
    %734 = vmatprep.subr.mxu0 0.0
    %735 = vmatpush2.msra.mxu0 0.0
    %736 = vmatprep.subr.mxu0 0.0
    %737 = vmatpush2.msra.mxu0 0.0
    %738 = vmatprep.subr.mxu0 0.0
    %739 = vmatpush2.msra.mxu0 0.0
    %740 = vmatprep.subr.mxu0 0.0
    %741 = vmatpush2.msra.mxu0 0.0
    %742 = vmatprep.subr.mxu0 0.0
    %743 = vmatpush2.msra.mxu0 0.0
    %744 = vmatprep.subr.mxu0 0.0
    %745 = vmatpush2.msra.mxu0 0.0
    %746 = vmatprep.subr.mxu0 0.0
    %747 = vmatpush2.msra.mxu0 0.0
    %748 = vmatprep.subr.mxu0 0.0
    %749 = vmatpush2.msra.mxu0 0.0
    %750 = vmatprep.mubr.f32.mxu0 0.0
    %751 = vmatmul.mubr.f32.gmra.mxu0 %v684
    %v752 = vpop.f32.mrf.mxu0
    %v753 = vadd.f32 0.0, %v752
    %v754 = vpop.f32.mrf.mxu0
    %v755 = vadd.f32 0.0, %v754
    %756 = vdwg.mxu0
    %v757 = vadd.f32 %v755, %v89
    %v758 = vxor.u32 %v757, 2147483648
    %v759 = vmul.f32 %v758, 1.442695
    %v760 = vpow.pop %v759
    %v761 = vadd.f32 %v760, 1.0
    %v762 = vrcp.pop %v761
    %v763 = vmul.f32 1.0, %v762
    %v764 = vtanh.pop %v757
    %v765 = vmul.f32 %v763, %v642
    %767 = vrot.lane.b32.xlu0 %v764, 64
    %v768 = vpop.permute.xlu0 %767
    %v770 = vmul.f32 %v763, %v768
    %772 = vrot.lane.b32.xlu0 %v770, 32
    %v773 = vpop.permute.xlu0 %772
    %v775 = vadd.f32 %v765, %v773
    %v776 = vtanh.pop %v775
    %778 = vrot.lane.b32.xlu0 %v776, 64
    %v779 = vpop.permute.xlu0 %778
    %v781 = vmul.f32 %v763, %v779
    %v782 = vadd.f32 %v235, %v753
    %v783 = vxor.u32 %v782, 2147483648
    %v784 = vmul.f32 %v783, 1.442695
    %v785 = vpow.pop %v784
    %v786 = vadd.f32 %v785, 1.0
    %v787 = vrcp.pop %v786
    %v788 = vmul.f32 1.0, %v787
    %v789 = vtanh.pop %v782
    %v790 = vmul.f32 %v788, %v667
    %792 = vrot.lane.b32.xlu0 %v789, 64
    %v793 = vpop.permute.xlu0 %792
    %v795 = vmul.f32 %v788, %v793
    %797 = vrot.lane.b32.xlu0 %v795, 32
    %v798 = vpop.permute.xlu0 %797
    %v800 = vadd.f32 %v790, %v798
    %v801 = vtanh.pop %v800
    %803 = vrot.lane.b32.xlu0 %v801, 64
    %v804 = vpop.permute.xlu0 %803
    %v806 = vmul.f32 %v788, %v804
    %808 = vrot.lane.b32.xlu0 %v806, 32
    %v809 = vpop.permute.xlu0 %808
    %812 = vrot.lane.b32.xlu0 %v781, 64
    %v813 = vpop.permute.xlu0 %812
    %v815 = vsel %vm281, %v809, %v813
    %v817 = vsel %vm283, %v815, 0
    %819 = vmatprep.subr.mxu0 0.0
    %820 = vmatpush1.msra.mxu0 0.0
    %821 = vmatprep.subr.mxu0 0.0
    %822 = vmatpush1.msra.mxu0 0.0
    %823 = vmatprep.subr.mxu0 0.0
    %824 = vmatpush1.msra.mxu0 0.0
    %825 = vmatprep.subr.mxu0 0.0
    %826 = vmatpush1.msra.mxu0 0.0
    %827 = vmatprep.subr.mxu0 0.0
    %828 = vmatpush1.msra.mxu0 0.0
    %829 = vmatprep.subr.mxu0 0.0
    %830 = vmatpush1.msra.mxu0 0.0
    %831 = vmatprep.subr.mxu0 0.0
    %832 = vmatpush1.msra.mxu0 0.0
    %833 = vmatprep.subr.mxu0 0.0
    %834 = vmatpush1.msra.mxu0 0.0
    %835 = vmatprep.subr.mxu0 %v88
    %836 = vmatpush1.msra.mxu0 %v87
    %837 = vmatprep.subr.mxu0 %v86
    %838 = vmatpush1.msra.mxu0 %v85
    %839 = vmatprep.subr.mxu0 %v84
    %840 = vmatpush1.msra.mxu0 %v83
    %841 = vmatprep.subr.mxu0 %v82
    %842 = vmatpush1.msra.mxu0 %v81
    %843 = vmatprep.subr.mxu0 %v80
    %844 = vmatpush1.msra.mxu0 %v79
    %845 = vmatprep.subr.mxu0 %v78
    %846 = vmatpush1.msra.mxu0 %v77
    %847 = vmatprep.subr.mxu0 %v76
    %848 = vmatpush1.msra.mxu0 %v75
    %849 = vmatprep.subr.mxu0 %v74
    %850 = vmatpush1.msra.mxu0 %v73
    %851 = vmatprep.subr.mxu0 0.0
    %852 = vmatpush2.msra.mxu0 0.0
    %853 = vmatprep.subr.mxu0 0.0
    %854 = vmatpush2.msra.mxu0 0.0
    %855 = vmatprep.subr.mxu0 0.0
    %856 = vmatpush2.msra.mxu0 0.0
    %857 = vmatprep.subr.mxu0 0.0
    %858 = vmatpush2.msra.mxu0 0.0
    %859 = vmatprep.subr.mxu0 0.0
    %860 = vmatpush2.msra.mxu0 0.0
    %861 = vmatprep.subr.mxu0 0.0
    %862 = vmatpush2.msra.mxu0 0.0
    %863 = vmatprep.subr.mxu0 0.0
    %864 = vmatpush2.msra.mxu0 0.0
    %865 = vmatprep.subr.mxu0 0.0
    %866 = vmatpush2.msra.mxu0 0.0
    %867 = vmatprep.subr.mxu0 0.0
    %868 = vmatpush2.msra.mxu0 0.0
    %869 = vmatprep.subr.mxu0 0.0
    %870 = vmatpush2.msra.mxu0 0.0
    %871 = vmatprep.subr.mxu0 0.0
    %872 = vmatpush2.msra.mxu0 0.0
    %873 = vmatprep.subr.mxu0 0.0
    %874 = vmatpush2.msra.mxu0 0.0
    %875 = vmatprep.subr.mxu0 0.0
    %876 = vmatpush2.msra.mxu0 0.0
    %877 = vmatprep.subr.mxu0 0.0
    %878 = vmatpush2.msra.mxu0 0.0
    %879 = vmatprep.subr.mxu0 0.0
    %880 = vmatpush2.msra.mxu0 0.0
    %881 = vmatprep.subr.mxu0 0.0
    %882 = vmatpush2.msra.mxu0 0.0
    %883 = vmatprep.mubr.f32.mxu0 0.0
    %884 = vmatmul.mubr.f32.gmra.mxu0 %v817
    %v885 = vpop.f32.mrf.mxu0
    %v886 = vadd.f32 0.0, %v885
    %v887 = vpop.f32.mrf.mxu0
    %v888 = vadd.f32 0.0, %v887
    %889 = vdwg.mxu0
    %v890 = vadd.f32 %v888, %v89
    %v891 = vxor.u32 %v890, 2147483648
    %v892 = vmul.f32 %v891, 1.442695
    %v893 = vpow.pop %v892
    %v894 = vadd.f32 %v893, 1.0
    %v895 = vrcp.pop %v894
    %v896 = vmul.f32 1.0, %v895
    %v897 = vtanh.pop %v890
    %v898 = vmul.f32 %v896, %v775
    %900 = vrot.lane.b32.xlu0 %v897, 64
    %v901 = vpop.permute.xlu0 %900
    %v903 = vmul.f32 %v896, %v901
    %905 = vrot.lane.b32.xlu0 %v903, 32
    %v906 = vpop.permute.xlu0 %905
    %v908 = vadd.f32 %v898, %v906
    %v909 = vtanh.pop %v908
    %911 = vrot.lane.b32.xlu0 %v909, 64
    %v912 = vpop.permute.xlu0 %911
    %v914 = vmul.f32 %v896, %v912
    %v915 = vadd.f32 %v240, %v886
    %v916 = vxor.u32 %v915, 2147483648
    %v917 = vmul.f32 %v916, 1.442695
    %v918 = vpow.pop %v917
    %v919 = vadd.f32 %v918, 1.0
    %v920 = vrcp.pop %v919
    %v921 = vmul.f32 1.0, %v920
    %v922 = vtanh.pop %v915
    %v923 = vmul.f32 %v921, %v800
    %925 = vrot.lane.b32.xlu0 %v922, 64
    %v926 = vpop.permute.xlu0 %925
    %v928 = vmul.f32 %v921, %v926
    %930 = vrot.lane.b32.xlu0 %v928, 32
    %v931 = vpop.permute.xlu0 %930
    %v933 = vadd.f32 %v923, %v931
    %v934 = vtanh.pop %v933
    %936 = vrot.lane.b32.xlu0 %v934, 64
    %v937 = vpop.permute.xlu0 %936
    %v939 = vmul.f32 %v921, %v937
    %941 = vrot.lane.b32.xlu0 %v939, 32
    %v942 = vpop.permute.xlu0 %941
    %945 = vrot.lane.b32.xlu0 %v914, 64
    %v946 = vpop.permute.xlu0 %945
    %v948 = vsel %vm281, %v942, %v946
    %v950 = vsel %vm283, %v948, 0
    %952 = vmatprep.subr.mxu0 0.0
    %953 = vmatpush1.msra.mxu0 0.0
    %954 = vmatprep.subr.mxu0 0.0
    %955 = vmatpush1.msra.mxu0 0.0
    %956 = vmatprep.subr.mxu0 0.0
    %957 = vmatpush1.msra.mxu0 0.0
    %958 = vmatprep.subr.mxu0 0.0
    %959 = vmatpush1.msra.mxu0 0.0
    %960 = vmatprep.subr.mxu0 0.0
    %961 = vmatpush1.msra.mxu0 0.0
    %962 = vmatprep.subr.mxu0 0.0
    %963 = vmatpush1.msra.mxu0 0.0
    %964 = vmatprep.subr.mxu0 0.0
    %965 = vmatpush1.msra.mxu0 0.0
    %966 = vmatprep.subr.mxu0 0.0
    %967 = vmatpush1.msra.mxu0 0.0
    %968 = vmatprep.subr.mxu0 %v88
    %969 = vmatpush1.msra.mxu0 %v87
    %970 = vmatprep.subr.mxu0 %v86
    %971 = vmatpush1.msra.mxu0 %v85
    %972 = vmatprep.subr.mxu0 %v84
    %973 = vmatpush1.msra.mxu0 %v83
    %974 = vmatprep.subr.mxu0 %v82
    %975 = vmatpush1.msra.mxu0 %v81
    %976 = vmatprep.subr.mxu0 %v80
    %977 = vmatpush1.msra.mxu0 %v79
    %978 = vmatprep.subr.mxu0 %v78
    %979 = vmatpush1.msra.mxu0 %v77
    %980 = vmatprep.subr.mxu0 %v76
    %981 = vmatpush1.msra.mxu0 %v75
    %982 = vmatprep.subr.mxu0 %v74
    %983 = vmatpush1.msra.mxu0 %v73
    %984 = vmatprep.subr.mxu0 0.0
    %985 = vmatpush2.msra.mxu0 0.0
    %986 = vmatprep.subr.mxu0 0.0
    %987 = vmatpush2.msra.mxu0 0.0
    %988 = vmatprep.subr.mxu0 0.0
    %989 = vmatpush2.msra.mxu0 0.0
    %990 = vmatprep.subr.mxu0 0.0
    %991 = vmatpush2.msra.mxu0 0.0
    %992 = vmatprep.subr.mxu0 0.0
    %993 = vmatpush2.msra.mxu0 0.0
    %994 = vmatprep.subr.mxu0 0.0
    %995 = vmatpush2.msra.mxu0 0.0
    %996 = vmatprep.subr.mxu0 0.0
    %997 = vmatpush2.msra.mxu0 0.0
    %998 = vmatprep.subr.mxu0 0.0
    %999 = vmatpush2.msra.mxu0 0.0
    %1000 = vmatprep.subr.mxu0 0.0
    %1001 = vmatpush2.msra.mxu0 0.0
    %1002 = vmatprep.subr.mxu0 0.0
    %1003 = vmatpush2.msra.mxu0 0.0
    %1004 = vmatprep.subr.mxu0 0.0
    %1005 = vmatpush2.msra.mxu0 0.0
    %1006 = vmatprep.subr.mxu0 0.0
    %1007 = vmatpush2.msra.mxu0 0.0
    %1008 = vmatprep.subr.mxu0 0.0
    %1009 = vmatpush2.msra.mxu0 0.0
    %1010 = vmatprep.subr.mxu0 0.0
    %1011 = vmatpush2.msra.mxu0 0.0
    %1012 = vmatprep.subr.mxu0 0.0
    %1013 = vmatpush2.msra.mxu0 0.0
    %1014 = vmatprep.subr.mxu0 0.0
    %1015 = vmatpush2.msra.mxu0 0.0
    %1016 = vmatprep.mubr.f32.mxu0 0.0
    %1017 = vmatmul.mubr.f32.gmra.mxu0 %v950
    %v1018 = vpop.f32.mrf.mxu0
    %v1019 = vadd.f32 0.0, %v1018
    %v1020 = vpop.f32.mrf.mxu0
    %v1021 = vadd.f32 0.0, %v1020
    %1022 = vdwg.mxu0
    %v1023 = vadd.f32 %v1021, %v89
    %v1024 = vxor.u32 %v1023, 2147483648
    %v1025 = vmul.f32 %v1024, 1.442695
    %v1026 = vpow.pop %v1025
    %v1027 = vadd.f32 %v1026, 1.0
    %v1028 = vrcp.pop %v1027
    %v1029 = vmul.f32 1.0, %v1028
    %v1030 = vtanh.pop %v1023
    %v1031 = vmul.f32 %v1029, %v908
    %1033 = vrot.lane.b32.xlu0 %v1030, 64
    %v1034 = vpop.permute.xlu0 %1033
    %v1036 = vmul.f32 %v1029, %v1034
    %1038 = vrot.lane.b32.xlu0 %v1036, 32
    %v1039 = vpop.permute.xlu0 %1038
    %v1041 = vadd.f32 %v1031, %v1039
    %v1042 = vtanh.pop %v1041
    %1044 = vrot.lane.b32.xlu0 %v1042, 64
    %v1045 = vpop.permute.xlu0 %1044
    %v1047 = vmul.f32 %v1029, %v1045
    %v1048 = vadd.f32 %v245, %v1019
    %v1049 = vxor.u32 %v1048, 2147483648
    %v1050 = vmul.f32 %v1049, 1.442695
    %v1051 = vpow.pop %v1050
    %v1052 = vadd.f32 %v1051, 1.0
    %v1053 = vrcp.pop %v1052
    %v1054 = vmul.f32 1.0, %v1053
    %v1055 = vtanh.pop %v1048
    %v1056 = vmul.f32 %v1054, %v933
    %1058 = vrot.lane.b32.xlu0 %v1055, 64
    %v1059 = vpop.permute.xlu0 %1058
    %v1061 = vmul.f32 %v1054, %v1059
    %1063 = vrot.lane.b32.xlu0 %v1061, 32
    %v1064 = vpop.permute.xlu0 %1063
    %v1066 = vadd.f32 %v1056, %v1064
    %v1067 = vtanh.pop %v1066
    %1069 = vrot.lane.b32.xlu0 %v1067, 64
    %v1070 = vpop.permute.xlu0 %1069
    %v1072 = vmul.f32 %v1054, %v1070
    %1074 = vrot.lane.b32.xlu0 %v1072, 32
    %v1075 = vpop.permute.xlu0 %1074
    %1078 = vrot.lane.b32.xlu0 %v1047, 64
    %v1079 = vpop.permute.xlu0 %1078
    %v1081 = vsel %vm281, %v1075, %v1079
    %v1083 = vsel %vm283, %v1081, 0
    %1085 = vmatprep.subr.mxu0 0.0
    %1086 = vmatpush1.msra.mxu0 0.0
    %1087 = vmatprep.subr.mxu0 0.0
    %1088 = vmatpush1.msra.mxu0 0.0
    %1089 = vmatprep.subr.mxu0 0.0
    %1090 = vmatpush1.msra.mxu0 0.0
    %1091 = vmatprep.subr.mxu0 0.0
    %1092 = vmatpush1.msra.mxu0 0.0
    %1093 = vmatprep.subr.mxu0 0.0
    %1094 = vmatpush1.msra.mxu0 0.0
    %1095 = vmatprep.subr.mxu0 0.0
    %1096 = vmatpush1.msra.mxu0 0.0
    %1097 = vmatprep.subr.mxu0 0.0
    %1098 = vmatpush1.msra.mxu0 0.0
    %1099 = vmatprep.subr.mxu0 0.0
    %1100 = vmatpush1.msra.mxu0 0.0
    %1101 = vmatprep.subr.mxu0 %v88
    %1102 = vmatpush1.msra.mxu0 %v87
    %1103 = vmatprep.subr.mxu0 %v86
    %1104 = vmatpush1.msra.mxu0 %v85
    %1105 = vmatprep.subr.mxu0 %v84
    %1106 = vmatpush1.msra.mxu0 %v83
    %1107 = vmatprep.subr.mxu0 %v82
    %1108 = vmatpush1.msra.mxu0 %v81
    %1109 = vmatprep.subr.mxu0 %v80
    %1110 = vmatpush1.msra.mxu0 %v79
    %1111 = vmatprep.subr.mxu0 %v78
    %1112 = vmatpush1.msra.mxu0 %v77
    %1113 = vmatprep.subr.mxu0 %v76
    %1114 = vmatpush1.msra.mxu0 %v75
    %1115 = vmatprep.subr.mxu0 %v74
    %1116 = vmatpush1.msra.mxu0 %v73
    %1117 = vmatprep.subr.mxu0 0.0
    %1118 = vmatpush2.msra.mxu0 0.0
    %1119 = vmatprep.subr.mxu0 0.0
    %1120 = vmatpush2.msra.mxu0 0.0
    %1121 = vmatprep.subr.mxu0 0.0
    %1122 = vmatpush2.msra.mxu0 0.0
    %1123 = vmatprep.subr.mxu0 0.0
    %1124 = vmatpush2.msra.mxu0 0.0
    %1125 = vmatprep.subr.mxu0 0.0
    %1126 = vmatpush2.msra.mxu0 0.0
    %1127 = vmatprep.subr.mxu0 0.0
    %1128 = vmatpush2.msra.mxu0 0.0
    %1129 = vmatprep.subr.mxu0 0.0
    %1130 = vmatpush2.msra.mxu0 0.0
    %1131 = vmatprep.subr.mxu0 0.0
    %1132 = vmatpush2.msra.mxu0 0.0
    %1133 = vmatprep.subr.mxu0 0.0
    %1134 = vmatpush2.msra.mxu0 0.0
    %1135 = vmatprep.subr.mxu0 0.0
    %1136 = vmatpush2.msra.mxu0 0.0
    %1137 = vmatprep.subr.mxu0 0.0
    %1138 = vmatpush2.msra.mxu0 0.0
    %1139 = vmatprep.subr.mxu0 0.0
    %1140 = vmatpush2.msra.mxu0 0.0
    %1141 = vmatprep.subr.mxu0 0.0
    %1142 = vmatpush2.msra.mxu0 0.0
    %1143 = vmatprep.subr.mxu0 0.0
    %1144 = vmatpush2.msra.mxu0 0.0
    %1145 = vmatprep.subr.mxu0 0.0
    %1146 = vmatpush2.msra.mxu0 0.0
    %1147 = vmatprep.subr.mxu0 0.0
    %1148 = vmatpush2.msra.mxu0 0.0
    %1149 = vmatprep.mubr.f32.mxu0 0.0
    %1150 = vmatmul.mubr.f32.gmra.mxu0 %v1083
    %v1151 = vpop.f32.mrf.mxu0
    %v1152 = vadd.f32 0.0, %v1151
    %v1153 = vpop.f32.mrf.mxu0
    %v1154 = vadd.f32 0.0, %v1153
    %1155 = vdwg.mxu0
    %v1156 = vadd.f32 %v1154, %v89
    %v1157 = vxor.u32 %v1156, 2147483648
    %v1158 = vmul.f32 %v1157, 1.442695
    %v1159 = vpow.pop %v1158
    %v1160 = vadd.f32 %v1159, 1.0
    %v1161 = vrcp.pop %v1160
    %v1162 = vmul.f32 1.0, %v1161
    %v1163 = vtanh.pop %v1156
    %v1164 = vmul.f32 %v1162, %v1041
    %1166 = vrot.lane.b32.xlu0 %v1163, 64
    %v1167 = vpop.permute.xlu0 %1166
    %v1169 = vmul.f32 %v1162, %v1167
    %1171 = vrot.lane.b32.xlu0 %v1169, 32
    %v1172 = vpop.permute.xlu0 %1171
    %v1174 = vadd.f32 %v1164, %v1172
    %v1175 = vtanh.pop %v1174
    %1177 = vrot.lane.b32.xlu0 %v1175, 64
    %v1178 = vpop.permute.xlu0 %1177
    %v1180 = vmul.f32 %v1162, %v1178
    %v1181 = vadd.f32 %v250, %v1152
    %v1182 = vxor.u32 %v1181, 2147483648
    %v1183 = vmul.f32 %v1182, 1.442695
    %v1184 = vpow.pop %v1183
    %v1185 = vadd.f32 %v1184, 1.0
    %v1186 = vrcp.pop %v1185
    %v1187 = vmul.f32 1.0, %v1186
    %v1188 = vtanh.pop %v1181
    %v1189 = vmul.f32 %v1187, %v1066
    %1191 = vrot.lane.b32.xlu0 %v1188, 64
    %v1192 = vpop.permute.xlu0 %1191
    %v1194 = vmul.f32 %v1187, %v1192
    %1196 = vrot.lane.b32.xlu0 %v1194, 32
    %v1197 = vpop.permute.xlu0 %1196
    %v1199 = vadd.f32 %v1189, %v1197
    %v1200 = vtanh.pop %v1199
    %1202 = vrot.lane.b32.xlu0 %v1200, 64
    %v1203 = vpop.permute.xlu0 %1202
    %v1205 = vmul.f32 %v1187, %v1203
    %1207 = vrot.lane.b32.xlu0 %v1205, 32
    %v1208 = vpop.permute.xlu0 %1207
    %1211 = vrot.lane.b32.xlu0 %v1180, 64
    %v1212 = vpop.permute.xlu0 %1211
    %v1214 = vsel %vm281, %v1208, %v1212
    %v1216 = vsel %vm283, %v1214, 0
    %1218 = vmatprep.subr.mxu0 0.0
    %1219 = vmatpush1.msra.mxu0 0.0
    %1220 = vmatprep.subr.mxu0 0.0
    %1221 = vmatpush1.msra.mxu0 0.0
    %1222 = vmatprep.subr.mxu0 0.0
    %1223 = vmatpush1.msra.mxu0 0.0
    %1224 = vmatprep.subr.mxu0 0.0
    %1225 = vmatpush1.msra.mxu0 0.0
    %1226 = vmatprep.subr.mxu0 0.0
    %1227 = vmatpush1.msra.mxu0 0.0
    %1228 = vmatprep.subr.mxu0 0.0
    %1229 = vmatpush1.msra.mxu0 0.0
    %1230 = vmatprep.subr.mxu0 0.0
    %1231 = vmatpush1.msra.mxu0 0.0
    %1232 = vmatprep.subr.mxu0 0.0
    %1233 = vmatpush1.msra.mxu0 0.0
    %1234 = vmatprep.subr.mxu0 %v88
    %1235 = vmatpush1.msra.mxu0 %v87
    %1236 = vmatprep.subr.mxu0 %v86
    %1237 = vmatpush1.msra.mxu0 %v85
    %1238 = vmatprep.subr.mxu0 %v84
    %1239 = vmatpush1.msra.mxu0 %v83
    %1240 = vmatprep.subr.mxu0 %v82
    %1241 = vmatpush1.msra.mxu0 %v81
    %1242 = vmatprep.subr.mxu0 %v80
    %1243 = vmatpush1.msra.mxu0 %v79
    %1244 = vmatprep.subr.mxu0 %v78
    %1245 = vmatpush1.msra.mxu0 %v77
    %1246 = vmatprep.subr.mxu0 %v76
    %1247 = vmatpush1.msra.mxu0 %v75
    %1248 = vmatprep.subr.mxu0 %v74
    %1249 = vmatpush1.msra.mxu0 %v73
    %1250 = vmatprep.subr.mxu0 0.0
    %1251 = vmatpush2.msra.mxu0 0.0
    %1252 = vmatprep.subr.mxu0 0.0
    %1253 = vmatpush2.msra.mxu0 0.0
    %1254 = vmatprep.subr.mxu0 0.0
    %1255 = vmatpush2.msra.mxu0 0.0
    %1256 = vmatprep.subr.mxu0 0.0
    %1257 = vmatpush2.msra.mxu0 0.0
    %1258 = vmatprep.subr.mxu0 0.0
    %1259 = vmatpush2.msra.mxu0 0.0
    %1260 = vmatprep.subr.mxu0 0.0
    %1261 = vmatpush2.msra.mxu0 0.0
    %1262 = vmatprep.subr.mxu0 0.0
    %1263 = vmatpush2.msra.mxu0 0.0
    %1264 = vmatprep.subr.mxu0 0.0
    %1265 = vmatpush2.msra.mxu0 0.0
    %1266 = vmatprep.subr.mxu0 0.0
    %1267 = vmatpush2.msra.mxu0 0.0
    %1268 = vmatprep.subr.mxu0 0.0
    %1269 = vmatpush2.msra.mxu0 0.0
    %1270 = vmatprep.subr.mxu0 0.0
    %1271 = vmatpush2.msra.mxu0 0.0
    %1272 = vmatprep.subr.mxu0 0.0
    %1273 = vmatpush2.msra.mxu0 0.0
    %1274 = vmatprep.subr.mxu0 0.0
    %1275 = vmatpush2.msra.mxu0 0.0
    %1276 = vmatprep.subr.mxu0 0.0
    %1277 = vmatpush2.msra.mxu0 0.0
    %1278 = vmatprep.subr.mxu0 0.0
    %1279 = vmatpush2.msra.mxu0 0.0
    %1280 = vmatprep.subr.mxu0 0.0
    %1281 = vmatpush2.msra.mxu0 0.0
    %1282 = vmatprep.mubr.f32.mxu0 0.0
    %1283 = vmatmul.mubr.f32.gmra.mxu0 %v1216
    %v1284 = vpop.f32.mrf.mxu0
    %v1285 = vpop.f32.mrf.mxu0
    %v1286 = vadd.f32 0.0, %v1285
    %1287 = vdwg.mxu0
    %v1288 = vadd.f32 %v1286, %v89
    %v1289 = vxor.u32 %v1288, 2147483648
    %v1290 = vmul.f32 %v1289, 1.442695
    %v1291 = vpow.pop %v1290
    %v1292 = vadd.f32 %v1291, 1.0
    %v1293 = vrcp.pop %v1292
    %v1294 = vmul.f32 1.0, %v1293
    %v1295 = vtanh.pop %v1288
    %v1296 = vmul.f32 %v1294, %v1174
    %1298 = vrot.lane.b32.xlu0 %v1295, 64
    %v1299 = vpop.permute.xlu0 %1298
    %v1301 = vmul.f32 %v1294, %v1299
    %1303 = vrot.lane.b32.xlu0 %v1301, 32
    %v1304 = vpop.permute.xlu0 %1303
    %v1306 = vadd.f32 %v1296, %v1304
    %v1307 = vtanh.pop %v1306
    %1309 = vrot.lane.b32.xlu0 %v1307, 64
    %v1310 = vpop.permute.xlu0 %1309
    %v1312 = vmul.f32 %v1294, %v1310
    %v1313 = vlaneseq
    %v1314 = vshrl.u32 %v1313, 7
    %v1315 = vsub.s32 0, %v1314
    %v1316 = vrot.slane %v70, %v1315
    %1318 = vrot.lane.b32.xlu0 %v1312, 32
    %v1319 = vpop.permute.xlu0 %1318
    %v1320 = vsel %vm281, %v1319, 0
    %1322 = vmatprep.subr.mxu0 0.0
    %1323 = vmatpush1.msra.mxu0 0.0
    %1324 = vmatprep.subr.mxu0 0.0
    %1325 = vmatpush1.msra.mxu0 0.0
    %1326 = vmatprep.subr.mxu0 0.0
    %1327 = vmatpush1.msra.mxu0 0.0
    %1328 = vmatprep.subr.mxu0 0.0
    %1329 = vmatpush1.msra.mxu0 0.0
    %1330 = vmatprep.subr.mxu0 0.0
    %1331 = vmatpush1.msra.mxu0 0.0
    %1332 = vmatprep.subr.mxu0 0.0
    %1333 = vmatpush1.msra.mxu0 0.0
    %1334 = vmatprep.subr.mxu0 0.0
    %1335 = vmatpush1.msra.mxu0 0.0
    %1336 = vmatprep.subr.mxu0 0.0
    %1337 = vmatpush1.msra.mxu0 0.0
    %1338 = vmatprep.subr.mxu0 0.0
    %1339 = vmatpush1.msra.mxu0 0.0
    %1340 = vmatprep.subr.mxu0 0.0
    %1341 = vmatpush1.msra.mxu0 0.0
    %1342 = vmatprep.subr.mxu0 0.0
    %1343 = vmatpush1.msra.mxu0 0.0
    %1344 = vmatprep.subr.mxu0 0.0
    %1345 = vmatpush1.msra.mxu0 0.0
    %1346 = vmatprep.subr.mxu0 0.0
    %1347 = vmatpush1.msra.mxu0 %v65
    %1348 = vmatprep.subr.mxu0 0.0
    %1349 = vmatpush1.msra.mxu0 %v64
    %1350 = vmatprep.subr.mxu0 0.0
    %1351 = vmatpush1.msra.mxu0 %v63
    %1352 = vmatprep.subr.mxu0 0.0
    %1353 = vmatpush1.msra.mxu0 %v62
    %1354 = vmatprep.subr.mxu0 0.0
    %1355 = vmatpush2.msra.mxu0 0.0
    %1356 = vmatprep.subr.mxu0 0.0
    %1357 = vmatpush2.msra.mxu0 0.0
    %1358 = vmatprep.subr.mxu0 0.0
    %1359 = vmatpush2.msra.mxu0 0.0
    %1360 = vmatprep.subr.mxu0 0.0
    %1361 = vmatpush2.msra.mxu0 0.0
    %1362 = vmatprep.subr.mxu0 0.0
    %1363 = vmatpush2.msra.mxu0 0.0
    %1364 = vmatprep.subr.mxu0 0.0
    %1365 = vmatpush2.msra.mxu0 0.0
    %1366 = vmatprep.subr.mxu0 0.0
    %1367 = vmatpush2.msra.mxu0 0.0
    %1368 = vmatprep.subr.mxu0 0.0
    %1369 = vmatpush2.msra.mxu0 0.0
    %1370 = vmatprep.subr.mxu0 0.0
    %1371 = vmatpush2.msra.mxu0 0.0
    %1372 = vmatprep.subr.mxu0 0.0
    %1373 = vmatpush2.msra.mxu0 0.0
    %1374 = vmatprep.subr.mxu0 0.0
    %1375 = vmatpush2.msra.mxu0 0.0
    %1376 = vmatprep.subr.mxu0 0.0
    %1377 = vmatpush2.msra.mxu0 0.0
    %1378 = vmatprep.subr.mxu0 0.0
    %1379 = vmatpush2.msra.mxu0 0.0
    %1380 = vmatprep.subr.mxu0 0.0
    %1381 = vmatpush2.msra.mxu0 0.0
    %1382 = vmatprep.subr.mxu0 0.0
    %1383 = vmatpush2.msra.mxu0 0.0
    %1384 = vmatprep.subr.mxu0 0.0
    %1385 = vmatpush2.msra.mxu0 0.0
    %1386 = vmatprep.mubr.f32.mxu0 0.0
    %1387 = vmatmul.mubr.f32.gmra.mxu0 %v1320
    %v1388 = vpop.f32.mrf.mxu0
    %v1389 = vadd.f32 %v1316, %v1388
    %v1390 = vpop.f32.mrf.mxu0
    %1391 = vdwg.mxu0
    %1392 = vrot.lane.b32.xlu0 %v382, 32
    %v1393 = vpop.permute.xlu0 %1392
    %1394 = vrot.lane.b32.xlu0 %v515, 32
    %v1395 = vpop.permute.xlu0 %1394
    %1396 = vrot.lane.b32.xlu0 %v648, 32
    %v1397 = vpop.permute.xlu0 %1396
    %1398 = vrot.lane.b32.xlu0 %v781, 32
    %v1399 = vpop.permute.xlu0 %1398
    %1400 = vrot.lane.b32.xlu0 %v914, 32
    %v1401 = vpop.permute.xlu0 %1400
    %1402 = vrot.lane.b32.xlu0 %v1047, 32
    %v1403 = vpop.permute.xlu0 %1402
    %1404 = vrot.lane.b32.xlu0 %v1180, 32
    %v1405 = vpop.permute.xlu0 %1404
    %v1406 = vsel %vm281, %v1393, 0
    %v1408 = vsel %vm281, %v1395, 0
    %v1410 = vsel %vm281, %v1397, 0
    %v1412 = vsel %vm281, %v1399, 0
    %v1414 = vsel %vm281, %v1401, 0
    %v1416 = vsel %vm281, %v1403, 0
    %v1418 = vsel %vm281, %v1405, 0
    %1420 = vmatprep.subr.mxu0 0.0
    %1421 = vmatpush1.msra.mxu0 0.0
    %1422 = vmatprep.subr.mxu0 0.0
    %1423 = vmatpush1.msra.mxu0 0.0
    %1424 = vmatprep.subr.mxu0 0.0
    %1425 = vmatpush1.msra.mxu0 0.0
    %1426 = vmatprep.subr.mxu0 0.0
    %1427 = vmatpush1.msra.mxu0 0.0
    %1428 = vmatprep.subr.mxu0 0.0
    %1429 = vmatpush1.msra.mxu0 0.0
    %1430 = vmatprep.subr.mxu0 0.0
    %1431 = vmatpush1.msra.mxu0 0.0
    %1432 = vmatprep.subr.mxu0 0.0
    %1433 = vmatpush1.msra.mxu0 0.0
    %1434 = vmatprep.subr.mxu0 0.0
    %1435 = vmatpush1.msra.mxu0 0.0
    %1436 = vmatprep.subr.mxu0 0.0
    %1437 = vmatpush1.msra.mxu0 0.0
    %1438 = vmatprep.subr.mxu0 0.0
    %1439 = vmatpush1.msra.mxu0 0.0
    %1440 = vmatprep.subr.mxu0 0.0
    %1441 = vmatpush1.msra.mxu0 0.0
    %1442 = vmatprep.subr.mxu0 0.0
    %1443 = vmatpush1.msra.mxu0 0.0
    %1444 = vmatprep.subr.mxu0 0.0
    %1445 = vmatpush1.msra.mxu0 %v61
    %1446 = vmatprep.subr.mxu0 0.0
    %1447 = vmatpush1.msra.mxu0 %v60
    %1448 = vmatprep.subr.mxu0 0.0
    %1449 = vmatpush1.msra.mxu0 %v59
    %1450 = vmatprep.subr.mxu0 0.0
    %1451 = vmatpush1.msra.mxu0 %v58
    %1452 = vmatprep.subr.mxu0 0.0
    %1453 = vmatpush2.msra.mxu0 0.0
    %1454 = vmatprep.subr.mxu0 0.0
    %1455 = vmatpush2.msra.mxu0 0.0
    %1456 = vmatprep.subr.mxu0 0.0
    %1457 = vmatpush2.msra.mxu0 0.0
    %1458 = vmatprep.subr.mxu0 0.0
    %1459 = vmatpush2.msra.mxu0 0.0
    %1460 = vmatprep.subr.mxu0 0.0
    %1461 = vmatpush2.msra.mxu0 0.0
    %1462 = vmatprep.subr.mxu0 0.0
    %1463 = vmatpush2.msra.mxu0 0.0
    %1464 = vmatprep.subr.mxu0 0.0
    %1465 = vmatpush2.msra.mxu0 0.0
    %1466 = vmatprep.subr.mxu0 0.0
    %1467 = vmatpush2.msra.mxu0 0.0
    %1468 = vmatprep.subr.mxu0 0.0
    %1469 = vmatpush2.msra.mxu0 0.0
    %1470 = vmatprep.subr.mxu0 0.0
    %1471 = vmatpush2.msra.mxu0 0.0
    %1472 = vmatprep.subr.mxu0 0.0
    %1473 = vmatpush2.msra.mxu0 0.0
    %1474 = vmatprep.subr.mxu0 0.0
    %1475 = vmatpush2.msra.mxu0 0.0
    %1476 = vmatprep.subr.mxu0 0.0
    %1477 = vmatpush2.msra.mxu0 0.0
    %1478 = vmatprep.subr.mxu0 0.0
    %1479 = vmatpush2.msra.mxu0 0.0
    %1480 = vmatprep.subr.mxu0 0.0
    %1481 = vmatpush2.msra.mxu0 0.0
    %1482 = vmatprep.subr.mxu0 0.0
    %1483 = vmatpush2.msra.mxu0 0.0
    %1484 = vmatprep.mubr.f32.mxu0 0.0
    %1485 = vmatmul.mubr.f32.gmra.mxu0 %v1406
    %v1486 = vpop.f32.mrf.mxu0
    %v1487 = vadd.f32 0.0, %v1486
    %v1488 = vpop.f32.mrf.mxu0
    %1489 = vmatprep.mubr.f32.mxu0 0.0
    %1490 = vmatmul.mubr.f32.gmra.mxu0 %v1408
    %v1491 = vpop.f32.mrf.mxu0
    %v1492 = vadd.f32 0.0, %v1491
    %v1493 = vpop.f32.mrf.mxu0
    %1494 = vmatprep.mubr.f32.mxu0 0.0
    %1495 = vmatmul.mubr.f32.gmra.mxu0 %v1410
    %v1496 = vpop.f32.mrf.mxu0
    %v1497 = vadd.f32 0.0, %v1496
    %v1498 = vpop.f32.mrf.mxu0
    %1499 = vmatprep.mubr.f32.mxu0 0.0
    %1500 = vmatmul.mubr.f32.gmra.mxu0 %v1412
    %v1501 = vpop.f32.mrf.mxu0
    %v1502 = vadd.f32 0.0, %v1501
    %v1503 = vpop.f32.mrf.mxu0
    %1504 = vmatprep.mubr.f32.mxu0 0.0
    %1505 = vmatmul.mubr.f32.gmra.mxu0 %v1414
    %v1506 = vpop.f32.mrf.mxu0
    %v1507 = vadd.f32 0.0, %v1506
    %v1508 = vpop.f32.mrf.mxu0
    %1509 = vmatprep.mubr.f32.mxu0 0.0
    %1510 = vmatmul.mubr.f32.gmra.mxu0 %v1416
    %v1511 = vpop.f32.mrf.mxu0
    %v1512 = vadd.f32 0.0, %v1511
    %v1513 = vpop.f32.mrf.mxu0
    %1514 = vmatprep.mubr.f32.mxu0 0.0
    %1515 = vmatmul.mubr.f32.gmra.mxu0 %v1418
    %v1516 = vpop.f32.mrf.mxu0
    %v1517 = vadd.f32 0.0, %v1516
    %v1518 = vpop.f32.mrf.mxu0
    %1519 = vmatprep.mubr.f32.mxu0 0.0
    %1520 = vmatmul.mubr.f32.gmra.mxu0 %v1320
    %v1521 = vpop.f32.mrf.mxu0
    %v1522 = vadd.f32 0.0, %v1521
    %v1523 = vpop.f32.mrf.mxu0
    %1524 = vdwg.mxu0
    %v1525 = vlaneseq
    %v1526 = vshrl.u32 %v1525, 7
    %v1527 = vsub.s32 0, %v1526
    %v1528 = vrot.slane %v1389, %v1527
    %v1529 = vadd.f32 %v1487, %v1528
    %v1530 = vtanh.pop %v1529
    %v1531 = vlaneseq
    %v1532 = vshrl.u32 %v1531, 7
    %v1533 = vsub.s32 0, %v1532
    %v1534 = vrot.slane %v71, %v1533
    %v1535 = vmul.f32 %v1530, %v1534
    %v1536 = vsel %vm281, %v1535, 0.0
    %1537 = vadd.xlane.f32.xlu0 %v1536
    %v1538 = vpop.xlane.xlu0 %1537
    %v1539 = vlaneseq
    %v1540 = vshrl.u32 %v1539, 7
    %v1541 = vsub.s32 1, %v1540
    %v1542 = vrot.slane %v1389, %v1541
    %v1543 = vadd.f32 %v1492, %v1542
    %v1544 = vtanh.pop %v1543
    %v1545 = vmul.f32 %v1544, %v1534
    %v1546 = vsel %vm281, %v1545, 0.0
    %1547 = vadd.xlane.f32.xlu0 %v1546
    %v1548 = vpop.xlane.xlu0 %1547
    %v1549 = vlaneseq
    %v1550 = vshrl.u32 %v1549, 7
    %v1551 = vsub.s32 2, %v1550
    %v1552 = vrot.slane %v1389, %v1551
    %v1553 = vadd.f32 %v1497, %v1552
    %v1554 = vtanh.pop %v1553
    %v1555 = vmul.f32 %v1554, %v1534
    %v1556 = vsel %vm281, %v1555, 0.0
    %1557 = vadd.xlane.f32.xlu0 %v1556
    %v1558 = vpop.xlane.xlu0 %1557
    %v1559 = vlaneseq
    %v1560 = vshrl.u32 %v1559, 7
    %v1561 = vsub.s32 3, %v1560
    %v1562 = vrot.slane %v1389, %v1561
    %v1563 = vadd.f32 %v1502, %v1562
    %v1564 = vtanh.pop %v1563
    %v1565 = vmul.f32 %v1564, %v1534
    %v1566 = vsel %vm281, %v1565, 0.0
    %1567 = vadd.xlane.f32.xlu0 %v1566
    %v1568 = vpop.xlane.xlu0 %1567
    %v1569 = vlaneseq
    %v1570 = vshrl.u32 %v1569, 7
    %v1571 = vsub.s32 4, %v1570
    %v1572 = vrot.slane %v1389, %v1571
    %v1573 = vadd.f32 %v1507, %v1572
    %v1574 = vtanh.pop %v1573
    %v1575 = vmul.f32 %v1574, %v1534
    %v1576 = vsel %vm281, %v1575, 0.0
    %1577 = vadd.xlane.f32.xlu0 %v1576
    %v1578 = vpop.xlane.xlu0 %1577
    %v1579 = vlaneseq
    %v1580 = vshrl.u32 %v1579, 7
    %v1581 = vsub.s32 5, %v1580
    %v1582 = vrot.slane %v1389, %v1581
    %v1583 = vadd.f32 %v1512, %v1582
    %v1584 = vtanh.pop %v1583
    %v1585 = vmul.f32 %v1584, %v1534
    %v1586 = vsel %vm281, %v1585, 0.0
    %1587 = vadd.xlane.f32.xlu0 %v1586
    %v1588 = vpop.xlane.xlu0 %1587
    %v1589 = vlaneseq
    %v1590 = vshrl.u32 %v1589, 7
    %v1591 = vsub.s32 6, %v1590
    %v1592 = vrot.slane %v1389, %v1591
    %v1593 = vadd.f32 %v1517, %v1592
    %v1594 = vtanh.pop %v1593
    %v1595 = vmul.f32 %v1594, %v1534
    %v1596 = vsel %vm281, %v1595, 0.0
    %1597 = vadd.xlane.f32.xlu0 %v1596
    %v1598 = vpop.xlane.xlu0 %1597
    %v1599 = vlaneseq
    %v1600 = vshrl.u32 %v1599, 7
    %v1601 = vsub.s32 7, %v1600
    %v1602 = vrot.slane %v1389, %v1601
    %v1603 = vadd.f32 %v1522, %v1602
    %v1604 = vtanh.pop %v1603
    %v1605 = vmul.f32 %v1604, %v1534
    %v1606 = vsel %vm281, %v1605, 0.0
    %1607 = vadd.xlane.f32.xlu0 %v1606
    %v1608 = vpop.xlane.xlu0 %1607
    %vm1609 = vcmask 7168
    %v1610 = vsel %vm1609, %v1538, %v1548
    %vm1611 = vcmask 15360
    %v1612 = vsel %vm1611, %v1610, %v1558
    %vm1613 = vcmask 23552
    %v1614 = vsel %vm1613, %v1612, %v1568
    %vm1615 = vcmask 31744
    %v1616 = vsel %vm1615, %v1614, %v1578
    %vm1617 = vcmask 39936
    %v1618 = vsel %vm1617, %v1616, %v1588
    %vm1619 = vcmask 48128
    %v1620 = vsel %vm1619, %v1618, %v1598
    %vm1621 = vcmask 56320
    %v1622 = vsel %vm1621, %v1620, %v1608
    %vm1623 = vcmask 64512
    %v1624 = vsel %vm1623, %v1622, -inf
    %v1625 = vrot.slane %v1624, 4
    %v1626 = vmax.f32 %v1624, %v1625
    %v1627 = vrot.slane %v1626, 2
    %v1628 = vmax.f32 %v1626, %v1627
    %v1629 = vrot.slane %v1628, 1
    %v1630 = vmax.f32 %v1628, %v1629
    %v1631 = vsub.f32 %v1622, %v1630
    %v1632 = vmul.f32 %v1631, 1.442695
    %v1633 = vpow.pop %v1632
    %v1634 = vsel %vm1623, %v1633, 0.0
    %v1635 = vrot.slane %v1634, 4
    %v1636 = vadd.f32 %v1634, %v1635
    %v1637 = vrot.slane %v1636, 2
    %v1638 = vadd.f32 %v1636, %v1637
    %v1639 = vrot.slane %v1638, 1
    %v1640 = vadd.f32 %v1638, %v1639
    %v1641 = vrcp.pop %v1640
    %v1642 = vmul.f32 %v1633, %v1641
    %1643 = vxpose.xlu0.b32.start [1/16] %v1642, 128
    %1644 = vxpose.xlu0.b32.cont [2/16] 0.0, 128
    %1645 = vxpose.xlu0.b32.cont [3/16] 0.0, 128
    %1646 = vxpose.xlu0.b32.cont [4/16] 0.0, 128
    %1647 = vxpose.xlu0.b32.cont [5/16] 0.0, 128
    %1648 = vxpose.xlu0.b32.cont [6/16] 0.0, 128
    %1649 = vxpose.xlu0.b32.cont [7/16] 0.0, 128
    %1650 = vxpose.xlu0.b32.cont [8/16] 0.0, 128
    %1651 = vxpose.xlu0.b32.cont [9/16] 0.0, 128
    %1652 = vxpose.xlu0.b32.cont [10/16] 0.0, 128
    %1653 = vxpose.xlu0.b32.cont [11/16] 0.0, 128
    %1654 = vxpose.xlu0.b32.cont [12/16] 0.0, 128
    %1655 = vxpose.xlu0.b32.cont [13/16] 0.0, 128
    %1656 = vxpose.xlu0.b32.cont [14/16] 0.0, 128
    %1657 = vxpose.xlu0.b32.cont [15/16] 0.0, 128
    %1658 = vxpose.xlu0.b32.end [16/16] 0.0, 128
    %v1659 = vpop.trf.xlu0
    %v1660 = vpop.trf.xlu0
    %v1661 = vpop.trf.xlu0
    %v1662 = vpop.trf.xlu0
    %v1663 = vpop.trf.xlu0
    %v1664 = vpop.trf.xlu0
    %v1665 = vpop.trf.xlu0
    %v1666 = vpop.trf.xlu0
    %v1667 = vpop.trf.xlu0
    %v1668 = vpop.trf.xlu0
    %v1669 = vpop.trf.xlu0
    %v1670 = vpop.trf.xlu0
    %v1671 = vpop.trf.xlu0
    %v1672 = vpop.trf.xlu0
    %v1673 = vpop.trf.xlu0
    %v1674 = vpop.trf.xlu0
    %1676 = vset.pattern.permute.xlu0 0
    %1677 = vperm.xlu0 %1676, %v1659
    %v1678 = vpop.permute.xlu0 %1677
    %v1680 = vmul.f32 %v1678, %v382
    %v1681 = vadd.f32 %v1680, 0.0
    %1682 = vset.pattern.permute.xlu0 1
    %1683 = vperm.xlu0 %1682, %v1659
    %v1684 = vpop.permute.xlu0 %1683
    %v1686 = vmul.f32 %v1684, %v515
    %v1687 = vadd.f32 %v1681, %v1686
    %1688 = vset.pattern.permute.xlu0 2
    %1689 = vperm.xlu0 %1688, %v1659
    %v1690 = vpop.permute.xlu0 %1689
    %v1692 = vmul.f32 %v1690, %v648
    %v1693 = vadd.f32 %v1687, %v1692
    %1694 = vset.pattern.permute.xlu0 3
    %1695 = vperm.xlu0 %1694, %v1659
    %v1696 = vpop.permute.xlu0 %1695
    %v1698 = vmul.f32 %v1696, %v781
    %v1699 = vadd.f32 %v1693, %v1698
    %1700 = vset.pattern.permute.xlu0 4
    %1701 = vperm.xlu0 %1700, %v1659
    %v1702 = vpop.permute.xlu0 %1701
    %v1704 = vmul.f32 %v1702, %v914
    %v1705 = vadd.f32 %v1699, %v1704
    %1706 = vset.pattern.permute.xlu0 5
    %1707 = vperm.xlu0 %1706, %v1659
    %v1708 = vpop.permute.xlu0 %1707
    %v1710 = vmul.f32 %v1708, %v1047
    %v1711 = vadd.f32 %v1705, %v1710
    %1712 = vset.pattern.permute.xlu0 6
    %1713 = vperm.xlu0 %1712, %v1659
    %v1714 = vpop.permute.xlu0 %1713
    %v1716 = vmul.f32 %v1714, %v1180
    %v1717 = vadd.f32 %v1711, %v1716
    %1718 = vset.pattern.permute.xlu0 7
    %1719 = vperm.xlu0 %1718, %v1659
    %v1720 = vpop.permute.xlu0 %1719
    %v1722 = vmul.f32 %v1720, %v1312
    %v1723 = vadd.f32 %v1717, %v1722
    %v1724 = vlaneseq
    %v1725 = vshrl.u32 %v1724, 7
    %v1726 = vsub.s32 0, %v1725
    %v1727 = vrot.slane %v72, %v1726
    %1729 = vrot.lane.b32.xlu0 %v1723, 32
    %v1730 = vpop.permute.xlu0 %1729
    %v1731 = vsel %vm281, %v1730, 0
    %1733 = vmatprep.subr.mxu0 0.0
    %1734 = vmatpush1.msra.mxu0 0.0
    %1735 = vmatprep.subr.mxu0 0.0
    %1736 = vmatpush1.msra.mxu0 0.0
    %1737 = vmatprep.subr.mxu0 0.0
    %1738 = vmatpush1.msra.mxu0 0.0
    %1739 = vmatprep.subr.mxu0 0.0
    %1740 = vmatpush1.msra.mxu0 0.0
    %1741 = vmatprep.subr.mxu0 0.0
    %1742 = vmatpush1.msra.mxu0 0.0
    %1743 = vmatprep.subr.mxu0 0.0
    %1744 = vmatpush1.msra.mxu0 0.0
    %1745 = vmatprep.subr.mxu0 0.0
    %1746 = vmatpush1.msra.mxu0 0.0
    %1747 = vmatprep.subr.mxu0 0.0
    %1748 = vmatpush1.msra.mxu0 0.0
    %1749 = vmatprep.subr.mxu0 0.0
    %1750 = vmatpush1.msra.mxu0 0.0
    %1751 = vmatprep.subr.mxu0 0.0
    %1752 = vmatpush1.msra.mxu0 0.0
    %1753 = vmatprep.subr.mxu0 0.0
    %1754 = vmatpush1.msra.mxu0 0.0
    %1755 = vmatprep.subr.mxu0 0.0
    %1756 = vmatpush1.msra.mxu0 0.0
    %1757 = vmatprep.subr.mxu0 0.0
    %1758 = vmatpush1.msra.mxu0 %v69
    %1759 = vmatprep.subr.mxu0 0.0
    %1760 = vmatpush1.msra.mxu0 %v68
    %1761 = vmatprep.subr.mxu0 0.0
    %1762 = vmatpush1.msra.mxu0 %v67
    %1763 = vmatprep.subr.mxu0 0.0
    %1764 = vmatpush1.msra.mxu0 %v66
    %1765 = vmatprep.subr.mxu0 0.0
    %1766 = vmatpush2.msra.mxu0 0.0
    %1767 = vmatprep.subr.mxu0 0.0
    %1768 = vmatpush2.msra.mxu0 0.0
    %1769 = vmatprep.subr.mxu0 0.0
    %1770 = vmatpush2.msra.mxu0 0.0
    %1771 = vmatprep.subr.mxu0 0.0
    %1772 = vmatpush2.msra.mxu0 0.0
    %1773 = vmatprep.subr.mxu0 0.0
    %1774 = vmatpush2.msra.mxu0 0.0
    %1775 = vmatprep.subr.mxu0 0.0
    %1776 = vmatpush2.msra.mxu0 0.0
    %1777 = vmatprep.subr.mxu0 0.0
    %1778 = vmatpush2.msra.mxu0 0.0
    %1779 = vmatprep.subr.mxu0 0.0
    %1780 = vmatpush2.msra.mxu0 0.0
    %1781 = vmatprep.subr.mxu0 0.0
    %1782 = vmatpush2.msra.mxu0 0.0
    %1783 = vmatprep.subr.mxu0 0.0
    %1784 = vmatpush2.msra.mxu0 0.0
    %1785 = vmatprep.subr.mxu0 0.0
    %1786 = vmatpush2.msra.mxu0 0.0
    %1787 = vmatprep.subr.mxu0 0.0
    %1788 = vmatpush2.msra.mxu0 0.0
    %1789 = vmatprep.subr.mxu0 0.0
    %1790 = vmatpush2.msra.mxu0 0.0
    %1791 = vmatprep.subr.mxu0 0.0
    %1792 = vmatpush2.msra.mxu0 0.0
    %1793 = vmatprep.subr.mxu0 0.0
    %1794 = vmatpush2.msra.mxu0 0.0
    %1795 = vmatprep.subr.mxu0 0.0
    %1796 = vmatpush2.msra.mxu0 0.0
    %1797 = vmatprep.mubr.f32.mxu0 0.0
    %1798 = vmatmul.mubr.f32.gmra.mxu0 %v1731
    %v1799 = vpop.f32.mrf.mxu0
    %v1800 = vadd.f32 %v1727, %v1799
    %v1801 = vpop.f32.mrf.mxu0
    %1802 = vdwg.mxu0
    %1803 = vst [vmem:[%s3] sm:$0xff] %v1800
    // Predicated region
    $region22: #{text_attn_model_forward.1} parent=1 // pred_check
      _
    $region23: #{text_attn_model_forward.1} parent=1 // pred_check_branch
      %1805 = sbr.rel (0) target = $region25
    $region24: #{text_attn_model_forward.1} parent=1 // pred_region
      _
    $region25: #{text_attn_model_forward.1} parent=1 // pred_fallthru
      _
    // Predicated region
    $region26: #{text_attn_model_forward.1} parent=1 // pred_check
      _
    $region27: #{text_attn_model_forward.1} parent=1 // pred_check_branch
      %1807 = sbr.rel (0) target = $region29
    $region28: #{text_attn_model_forward.1} parent=1 // pred_region
      _
    $region29: #{text_attn_model_forward.1} parent=1 // pred_fallthru
      _
    %1808 = vsyncpa [#allocation3], 1
    %1809 = vsyncpa [#allocation5], 1

</llo_original>
